<compile_context>
chip_gen: v6e
topology: v6e:2x2x1
jax: 0.10.0
libtpu: 0.0.40
codegen_flags: <defaults>
</compile_context>

<pallas_src>
import jax
import jax.numpy as jnp
from jax.experimental import pallas as pl
from jax.experimental.pallas import tpu as pltpu


def sage_gcn_kernel(src_ref, neigh_ref, w_self_ref, w_neigh_ref, out_ref):
    # src_ref:     (TN, D)      bf16
    # neigh_ref:   (TN, K, D)   bf16
    # w_self_ref:  (D, H_pad)   f32
    # w_neigh_ref: (D, H_pad)   f32   (already divided by K in the wrapper)
    # out_ref:     (TN, H_pad)  f32
    src = src_ref[...].astype(jnp.float32)                            # (TN, D)
    # 1/K is folded into w_neigh, so a plain sum suffices (VPU adds only).
    neigh_sum = jnp.sum(neigh_ref[...].astype(jnp.float32), axis=1)   # (TN, D)
    hidden = jnp.dot(src, w_self_ref[...],
                     preferred_element_type=jnp.float32)              # (TN, H_pad)
    hidden = hidden + jnp.dot(neigh_sum, w_neigh_ref[...],
                              preferred_element_type=jnp.float32)
    out_ref[...] = jnp.maximum(hidden, 0.0).astype(out_ref.dtype)     # relu


def _round_up(x, m):
    return (x + m - 1) // m * m


def sage_gcn_forward(src, neigh, w_self, w_neigh, *, tile_n=256,
                     vmem_budget_bytes=24 << 20):
    """src: (N, D) f32, neigh: (N, K, D) f32, w_self/w_neigh: (D, H) f32."""
    N, D = src.shape
    _, K, _ = neigh.shape
    H = w_self.shape[1]

    # ---- wrapper-side prep (done once, outside the kernel) -----------------
    # Fold the 1/K of the neighbor mean into the neighbor weight.
    w_self_f = w_self.astype(jnp.float32)
    w_neigh_f = (w_neigh / K).astype(jnp.float32)

    # Lane-dense output: pad H to a multiple of 128 so stores are unmasked.
    H_pad = _round_up(H, 128)
    if H_pad != H:
        w_self_f = jnp.pad(w_self_f, ((0, 0), (0, H_pad - H)))
        w_neigh_f = jnp.pad(w_neigh_f, ((0, 0), (0, H_pad - H)))

    # bf16 storage halves HBM traffic on the dominant feature streams;
    # accumulation stays in f32 inside the kernel.
    src_bf = src.astype(jnp.bfloat16)
    neigh_bf = neigh.astype(jnp.bfloat16)

    # ---- tile selection -----------------------------------------------------
    # Keep the double-buffered working set under a conservative VMEM budget and
    # keep the grid length >= 2 so megacore chips can split the parallel axis.
    bytes_per_row = 2 * (K * D * 2 + D * 2 + H_pad * 4)   # x2: double buffering
    tile_n = min(tile_n, max(8, (vmem_budget_bytes // bytes_per_row) // 8 * 8))
    tile_n = min(tile_n, _round_up(N, 8))
    while tile_n > 8 and pl.cdiv(N, tile_n) < 2:
        tile_n = max(8, (tile_n // 2) // 8 * 8)

    N_pad = _round_up(N, tile_n)
    if N_pad != N:
        src_bf = jnp.pad(src_bf, ((0, N_pad - N), (0, 0)))
        neigh_bf = jnp.pad(neigh_bf, ((0, N_pad - N), (0, 0), (0, 0)))

    grid = (N_pad // tile_n,)
    cost = pl.CostEstimate(
        flops=2 * N_pad * (2 * D) * H_pad,
        transcendentals=0,
        bytes_accessed=(N_pad * K * D * 2        # neighbor stream (bf16)
                        + N_pad * D * 2          # src stream (bf16)
                        + 2 * D * H_pad * 4      # weights (f32)
                        + N_pad * H_pad * 4),    # output (f32)
    )

    out = pl.pallas_call(
        sage_gcn_kernel,
        out_shape=jax.ShapeDtypeStruct((N_pad, H_pad), jnp.float32),
        grid_spec=pltpu.PrefetchScalarGridSpec(
            num_scalar_prefetch=0,
            grid=grid,
            in_specs=[
                pl.BlockSpec((tile_n, D), lambda i: (i, 0)),        # src tile
                pl.BlockSpec((tile_n, K, D), lambda i: (i, 0, 0)),  # neighbor tile
                pl.BlockSpec((D, H_pad), lambda i: (0, 0)),         # W_self (resident)
                pl.BlockSpec((D, H_pad), lambda i: (0, 0)),         # W_neigh/K (resident)
            ],
            out_specs=pl.BlockSpec((tile_n, H_pad), lambda i: (i, 0)),
        ),
        compiler_params=pltpu.CompilerParams(
            dimension_semantics=("parallel",)),
        cost_estimate=cost,
    )(src_bf, neigh_bf, w_self_f, w_neigh_f)

    return out[:N, :H]


def kaiming_uniform(key, shape):
    # Matches torch.nn.init.kaiming_uniform_ defaults: a=0, fan_in mode,
    # bound = sqrt(6 / fan_in), fan_in = shape[0] for an [in, out] matrix.
    fan_in = shape[0]
    bound = (6.0 / fan_in) ** 0.5
    return jax.random.uniform(key, shape, jnp.float32, minval=-bound, maxval=bound)


def reference_forward(src, neigh, w_self, w_neigh):
    aggr = jnp.mean(neigh, axis=1)
    hp = jax.lax.Precision.HIGHEST
    return jax.nn.relu(jnp.dot(src, w_self, precision=hp)
                       + jnp.dot(aggr, w_neigh, precision=hp))


if __name__ == "__main__":
    # nodes, neighbors-per-node, input_dim, hidden_dim (MXU/lane-aligned demo sizes)
    N, K, D, H = 256, 8, 128, 128

    key = jax.random.PRNGKey(0)
    k_src, k_neigh, k_ws, k_wn = jax.random.split(key, 4)

    src = jax.random.normal(k_src, (N, D), jnp.float32)
    neigh = jax.random.normal(k_neigh, (N, K, D), jnp.float32)
    w_self = kaiming_uniform(k_ws, (D, H))     # SageGCN.weight
    w_neigh = kaiming_uniform(k_wn, (D, H))    # NeighborAggregator.weight

    out = sage_gcn_forward(src, neigh, w_self, w_neigh)
    out = jax.block_until_ready(out)

    # Reference uses the same bf16-quantized features the kernel reads from HBM.
    src_q = src.astype(jnp.bfloat16).astype(jnp.float32)
    neigh_q = neigh.astype(jnp.bfloat16).astype(jnp.float32)
    ref = reference_forward(src_q, neigh_q, w_self, w_neigh)

    assert out.shape == (N, H)
    assert jnp.allclose(out, ref, atol=1e-2, rtol=1e-2), "mismatch vs reference"

    print("KERNEL_OK")
</pallas_src>

<mosaic_0001>
module attributes {stable_mosaic.version = 11 : i64} {
  func.func @sage_gcn_kernel(%arg0: i32, %arg1: memref<128x128xbf16, #tpu.memory_space<vmem>>, %arg2: memref<128x8x128xbf16, #tpu.memory_space<vmem>>, %arg3: memref<128x128xf32, #tpu.memory_space<vmem>>, %arg4: memref<128x128xf32, #tpu.memory_space<vmem>>, %arg5: memref<128x128xf32, #tpu.memory_space<vmem>>) attributes {dimension_semantics = [#tpu.dimension_semantics<parallel>], iteration_bounds = array<i64: 2>, scalar_prefetch = 0 : i64, scratch_operands = 0 : i64, tpu.core_type = #tpu.core_type<tc>, window_params = [{transform_indices = @transform_0, window_bounds = array<i64: 128, 128>}, {transform_indices = @transform_1, window_bounds = array<i64: 128, 8, 128>}, {pipeline_mode = #tpu.pipeline_mode<synchronous>, transform_indices = @transform_2, window_bounds = array<i64: 128, 128>}, {pipeline_mode = #tpu.pipeline_mode<synchronous>, transform_indices = @transform_3, window_bounds = array<i64: 128, 128>}, {transform_indices = @transform_4, window_bounds = array<i64: 128, 128>}]} {
    %c0 = arith.constant 0 : index
    %c0_0 = arith.constant 0 : index
    %0 = vector.load %arg1[%c0, %c0_0] : memref<128x128xbf16, #tpu.memory_space<vmem>>, vector<128x128xbf16>
    %1 = arith.extf %0 : vector<128x128xbf16> to vector<128x128xf32>
    %c0_1 = arith.constant 0 : index
    %c0_2 = arith.constant 0 : index
    %c0_3 = arith.constant 0 : index
    %2 = vector.load %arg2[%c0_1, %c0_2, %c0_3] : memref<128x8x128xbf16, #tpu.memory_space<vmem>>, vector<128x8x128xbf16>
    %3 = arith.extf %2 : vector<128x8x128xbf16> to vector<128x8x128xf32>
    %cst = arith.constant dense<0.000000e+00> : vector<128x128xf32>
    %4 = vector.multi_reduction <add>, %3, %cst [1] : vector<128x8x128xf32> to vector<128x128xf32>
    %c0_4 = arith.constant 0 : index
    %c0_5 = arith.constant 0 : index
    %5 = vector.load %arg3[%c0_4, %c0_5] : memref<128x128xf32, #tpu.memory_space<vmem>>, vector<128x128xf32>
    %cst_6 = arith.constant dense<0.000000e+00> : vector<128x128xf32>
    %6 = tpu.matmul %1, %5, %cst_6 {dimension_numbers = #tpu.dot_dimension_numbers<[1], [0], [0], [1], [0, 0, 1, 1], [], []>} : vector<128x128xf32>, vector<128x128xf32>, vector<128x128xf32> -> vector<128x128xf32>
    %c0_7 = arith.constant 0 : index
    %c0_8 = arith.constant 0 : index
    %7 = vector.load %arg4[%c0_7, %c0_8] : memref<128x128xf32, #tpu.memory_space<vmem>>, vector<128x128xf32>
    %cst_9 = arith.constant dense<0.000000e+00> : vector<128x128xf32>
    %8 = tpu.matmul %4, %7, %cst_9 {dimension_numbers = #tpu.dot_dimension_numbers<[1], [0], [0], [1], [0, 0, 1, 1], [], []>} : vector<128x128xf32>, vector<128x128xf32>, vector<128x128xf32> -> vector<128x128xf32>
    %9 = arith.addf %6, %8 : vector<128x128xf32>
    %cst_10 = arith.constant 0.000000e+00 : f32
    %10 = vector.broadcast %cst_10 : f32 to vector<128x128xf32>
    %11 = arith.maximumf %9, %10 : vector<128x128xf32>
    %c0_11 = arith.constant 0 : index
    %c0_12 = arith.constant 0 : index
    %12 = vector.load %arg5[%c0_11, %c0_12] : memref<128x128xf32, #tpu.memory_space<vmem>>, vector<128x128xf32>
    tpu.vector_store %arg5[%c0_11, %c0_12], %11 {strides = array<i32>} : memref<128x128xf32, #tpu.memory_space<vmem>>, vector<128x128xf32>,
    return
  }
  func.func @transform_0(%arg0: i32) -> (i32, i32) {
    %c0_i32 = arith.constant 0 : i32
    %c0_i32_0 = arith.constant 0 : i32
    return %arg0, %c0_i32 : i32, i32
  }
  func.func @transform_1(%arg0: i32) -> (i32, i32, i32) {
    %c0_i32 = arith.constant 0 : i32
    %c0_i32_0 = arith.constant 0 : i32
    %c0_i32_1 = arith.constant 0 : i32
    return %arg0, %c0_i32, %c0_i32_0 : i32, i32, i32
  }
  func.func @transform_2(%arg0: i32) -> (i32, i32) {
    %c0_i32 = arith.constant 0 : i32
    %c0_i32_0 = arith.constant 0 : i32
    %c0_i32_1 = arith.constant 0 : i32
    return %c0_i32, %c0_i32_0 : i32, i32
  }
  func.func @transform_3(%arg0: i32) -> (i32, i32) {
    %c0_i32 = arith.constant 0 : i32
    %c0_i32_0 = arith.constant 0 : i32
    %c0_i32_1 = arith.constant 0 : i32
    return %c0_i32, %c0_i32_0 : i32, i32
  }
  func.func @transform_4(%arg0: i32) -> (i32, i32) {
    %c0_i32 = arith.constant 0 : i32
    %c0_i32_0 = arith.constant 0 : i32
    return %arg0, %c0_i32 : i32, i32
  }
}

</mosaic_0001>

<llo_original>
// kernel: tpu_custom_call.1
$region0: #{tpu_custom_call.1}
  #allocation0 [shape = 'u32[]', space=smem, size = 0x4, offset = 0x4, fixed_abs, tag = 'smem constant byte address 0x4 - core index']
  #allocation1 [shape = 'u32[144,128]{1,0:T(1,128)}', space=vmem, size = 0x12000, scoped, tag = 'internal scratch']
  %s0 = inlined_call_operand.hbm [shape: bf16[256,128], index: 0, kind: input, shape index: {}]
  %s1 = inlined_call_operand.hbm [shape: bf16[256,8,128], index: 1, kind: input, shape index: {}]
  %s2 = inlined_call_operand.hbm [shape: f32[128,128], index: 2, kind: input, shape index: {}]
  %s3 = inlined_call_operand.hbm [shape: f32[128,128], index: 3, kind: input, shape index: {}]
  %s4 = inlined_call_operand.hbm [shape: f32[256,128], index: 4, kind: output, shape index: {}]
  %s5 = sld [smem:[#allocation0]]
  $region65: #{tpu_custom_call.1} parent=0
    _
  %s7 = ssub.s32 1, %s5
  %s8 = scalar_select 0, %s7, %s5
  $region1: #{tpu_custom_call.1} parent=0
    #allocation2 [shape = 'u8[65536]{0}', space=vmem, size = 0x10000, scoped, tag = 'input window, operand 0']
    #allocation3 [shape = 's32[2]{0}', space=sflag, size = 0x8, scoped, tag = 'scoped memory for tpu_custom_call.1']
    #allocation4 [shape = 's32[2]{0}', space=sflag, size = 0x8, scoped, tag = 'scoped memory for tpu_custom_call.1']
    #allocation5 [shape = 'u8[524288]{0}', space=vmem, size = 0x80000, scoped, tag = 'input window, operand 1']
    #allocation6 [shape = 's32[2]{0}', space=sflag, size = 0x8, scoped, tag = 'scoped memory for tpu_custom_call.1']
    #allocation7 [shape = 'u8[65536]{0}', space=vmem, size = 0x10000, scoped, tag = 'input window, operand 2, single buffered']
    #allocation8 [shape = 'u8[65536]{0}', space=vmem, size = 0x10000, scoped, tag = 'input window, operand 3, single buffered']
    #allocation9 [shape = 's32[1]{0}', space=sflag, size = 0x4, scoped, tag = 'scoped memory for tpu_custom_call.1']
    #allocation10 [shape = 'u8[131072]{0}', space=vmem, size = 0x20000, scoped, tag = 'output window, operand 0']
    %9 = vsyncpa [#allocation3], 0
    %s10 = scalar_lea.sflag [#allocation3], 1
    %11 = vsyncpa %s10, 0
    %12 = vsyncpa [#allocation6], 0
    %s13 = scalar_lea.sflag [#allocation6], 1
    %14 = vsyncpa %s13, 0
    %15 = vsyncpa [#allocation9], 0
    %16 = vsyncpa [#allocation4], 0
    %s17 = scalar_lea.sflag [#allocation4], 1
    %18 = vsyncpa %s17, 0
    loop: start=0, step=1, limit=4
    $region2: #{tpu_custom_call.1} parent=1 // loop_pre_header
      _
    $region3: #{tpu_custom_call.1} parent=1 // loop_header
      %s20 = sphi 0, %s24
      %p21 = scmp.ge.s32.totalorder %s20, 4
      %s30 = sphi 0, %s32
      %s33 = sphi 0, %s30
      %s34 = sphi 0, %s33
      %s50 = sphi 0, %s34
      %s56 = sphi 0, %s58
      %s59 = sphi 0, %s56
      %s60 = sphi 0, %s59
      %s76 = sphi 0, %s60
      %s80 = sphi 0, %s80
      %s82 = sphi 0, %s80
      %s83 = sphi 0, %s82
      %s97 = sphi 0, %s83
      %s101 = sphi 0, %s101
      %s103 = sphi 0, %s101
      %s104 = sphi 0, %s103
      %s118 = sphi 0, %s104
      %s124 = sphi 0, %s126
      %s127 = sphi 0, %s124
      %s128 = sphi 0, %s127
      %s144 = sphi 0, %s128
    $region4: #{tpu_custom_call.1} parent=1 // loop_header_branch
      %23 = sbr.rel (%p21) target = $region8
    $region5: #{tpu_custom_call.1} parent=1 // loop_body
      %s25 = ssub.s32 %s20, 1
      %s26 = ssub.s32 %s20, 2
      %s27 = sadd.s32 %s20, 1
      %s28 = ssub.s32 %s20, %s27
      %p29 = scmp.eq.s32.totalorder %s28, 0
      %s31 = sadd.s32 %s30, 1
      %s32 = scalar_select %p29, %s30, %s31
      %p35 = pneg %p29
      %p36 = scmp.eq.s32.totalorder %s20, 1
      %p37 = por %p35, %p36
      %p38 = scmp.ne.s32.totalorder %s30, %s33
      %p39 = scmp.eq.s32.totalorder %s20, 0
      %p40 = por %p38, %p39
      %p41 = scmp.ne.s32.totalorder %s30, %s33
      %p42 = scmp.eq.s32.totalorder %s25, 1
      %p43 = por %p41, %p42
      %p44 = scmp.ne.s32.totalorder %s33, %s34
      %p45 = scmp.eq.s32.totalorder %s25, 0
      %p46 = por %p44, %p45
      %p47 = scmp.ne.s32.totalorder %s33, %s34
      %p48 = scmp.eq.s32.totalorder %s26, 1
      %p49 = por %p47, %p48
      %p51 = scmp.ne.s32.totalorder %s34, %s50
      %p52 = scmp.eq.s32.totalorder %s26, 0
      %p53 = por %p51, %p52
      %s54 = ssub.s32 %s20, %s27
      %p55 = scmp.eq.s32.totalorder %s54, 0
      %s57 = sadd.s32 %s56, 1
      %s58 = scalar_select %p55, %s56, %s57
      %p61 = pneg %p55
      %p62 = scmp.eq.s32.totalorder %s20, 1
      %p63 = por %p61, %p62
      %p64 = scmp.ne.s32.totalorder %s56, %s59
      %p65 = scmp.eq.s32.totalorder %s20, 0
      %p66 = por %p64, %p65
      %p67 = scmp.ne.s32.totalorder %s56, %s59
      %p68 = scmp.eq.s32.totalorder %s25, 1
      %p69 = por %p67, %p68
      %p70 = scmp.ne.s32.totalorder %s59, %s60
      %p71 = scmp.eq.s32.totalorder %s25, 0
      %p72 = por %p70, %p71
      %p73 = scmp.ne.s32.totalorder %s59, %s60
      %p74 = scmp.eq.s32.totalorder %s26, 1
      %p75 = por %p73, %p74
      %p77 = scmp.ne.s32.totalorder %s60, %s76
      %p78 = scmp.eq.s32.totalorder %s26, 0
      %p79 = por %p77, %p78
      %s81 = sadd.s32 %s80, 1
      %p84 = scmp.eq.s32.totalorder %s20, 1
      %p85 = scmp.ne.s32.totalorder %s80, %s82
      %p86 = scmp.eq.s32.totalorder %s20, 0
      %p87 = por %p85, %p86
      %p88 = scmp.ne.s32.totalorder %s80, %s82
      %p89 = scmp.eq.s32.totalorder %s25, 1
      %p90 = por %p88, %p89
      %p91 = scmp.ne.s32.totalorder %s82, %s83
      %p92 = scmp.eq.s32.totalorder %s25, 0
      %p93 = por %p91, %p92
      %p94 = scmp.ne.s32.totalorder %s82, %s83
      %p95 = scmp.eq.s32.totalorder %s26, 1
      %p96 = por %p94, %p95
      %p98 = scmp.ne.s32.totalorder %s83, %s97
      %p99 = scmp.eq.s32.totalorder %s26, 0
      %p100 = por %p98, %p99
      %s102 = sadd.s32 %s101, 1
      %p105 = scmp.eq.s32.totalorder %s20, 1
      %p106 = scmp.ne.s32.totalorder %s101, %s103
      %p107 = scmp.eq.s32.totalorder %s20, 0
      %p108 = por %p106, %p107
      %p109 = scmp.ne.s32.totalorder %s101, %s103
      %p110 = scmp.eq.s32.totalorder %s25, 1
      %p111 = por %p109, %p110
      %p112 = scmp.ne.s32.totalorder %s103, %s104
      %p113 = scmp.eq.s32.totalorder %s25, 0
      %p114 = por %p112, %p113
      %p115 = scmp.ne.s32.totalorder %s103, %s104
      %p116 = scmp.eq.s32.totalorder %s26, 1
      %p117 = por %p115, %p116
      %p119 = scmp.ne.s32.totalorder %s104, %s118
      %p120 = scmp.eq.s32.totalorder %s26, 0
      %p121 = por %p119, %p120
      %s122 = ssub.s32 %s20, %s27
      %p123 = scmp.eq.s32.totalorder %s122, 0
      %s125 = sadd.s32 %s124, 1
      %s126 = scalar_select %p123, %s124, %s125
      %p129 = pneg %p123
      %p130 = scmp.eq.s32.totalorder %s20, 1
      %p131 = por %p129, %p130
      %p132 = scmp.ne.s32.totalorder %s124, %s127
      %p133 = scmp.eq.s32.totalorder %s20, 0
      %p134 = por %p132, %p133
      %p135 = scmp.ne.s32.totalorder %s124, %s127
      %p136 = scmp.eq.s32.totalorder %s25, 1
      %p137 = por %p135, %p136
      %p138 = scmp.ne.s32.totalorder %s127, %s128
      %p139 = scmp.eq.s32.totalorder %s25, 0
      %p140 = por %p138, %p139
      %p141 = scmp.ne.s32.totalorder %s127, %s128
      %p142 = scmp.eq.s32.totalorder %s26, 1
      %p143 = por %p141, %p142
      %p145 = scmp.ne.s32.totalorder %s128, %s144
      %p146 = scmp.eq.s32.totalorder %s26, 0
      %p147 = por %p145, %p146
      %p148 = scmp.le.s32.totalorder 1, %s20
      %p149 = scmp.lt.s32.totalorder %s20, 3
      %p150 = pnand %p148, %p149
      %p151 = pneg %p150
      // Predicated region
      $region9: #{tpu_custom_call.1} parent=5 // pred_check
        _
      $region10: #{tpu_custom_call.1} parent=5 // pred_check_branch
        %153 = sbr.rel (%p150) target = $region12
      $region11: #{tpu_custom_call.1} parent=5 // pred_region
        %s154 = ssub.s32 %s20, 1
        // Predicated region
        $region13: #{tpu_custom_call.1} parent=11 // pred_check
          %p155 = pneg %p93
        $region14: #{tpu_custom_call.1} parent=11 // pred_check_branch
          %157 = sbr.rel (%p155) target = $region16
        $region15: #{tpu_custom_call.1} parent=11 // pred_region
          %s159 = ssub.s32 2048, 2048
          %160 = vsyncadd [#allocation6], %s159
          %s161 = sshll.u32 [#allocation7], 4
          %s162 = int_to_ptr.vmem [resolvable:$true] %s161
          %167 = dma.hbm_to_vmem [thread:$0]  %s2, 2048, %s162, [#allocation6], 128, 128, 8
        $region16: #{tpu_custom_call.1} parent=11 // pred_fallthru
          _
        // Predicated region
        $region17: #{tpu_custom_call.1} parent=11 // pred_check
          %p168 = pneg %p114
        $region18: #{tpu_custom_call.1} parent=11 // pred_check_branch
          %170 = sbr.rel (%p168) target = $region20
        $region19: #{tpu_custom_call.1} parent=11 // pred_region
          %s172 = ssub.s32 2048, 2048
          %173 = vsyncadd [#allocation9], %s172
          %s174 = sshll.u32 [#allocation8], 4
          %s175 = int_to_ptr.vmem [resolvable:$true] %s174
          %180 = dma.hbm_to_vmem [thread:$0]  %s3, 2048, %s175, [#allocation9], 128, 128, 8
        $region20: #{tpu_custom_call.1} parent=11 // pred_fallthru
          _
      $region12: #{tpu_custom_call.1} parent=5 // pred_fallthru
        _
      %p181 = scmp.lt.s32.totalorder %s20, 2
      // Predicated region
      $region21: #{tpu_custom_call.1} parent=5 // pred_check
        %p182 = pneg %p181
      $region22: #{tpu_custom_call.1} parent=5 // pred_check_branch
        %184 = sbr.rel (%p182) target = $region24
      $region23: #{tpu_custom_call.1} parent=5 // pred_region
        // Predicated region
        $region25: #{tpu_custom_call.1} parent=23 // pred_check
          %p185 = pneg %p40
        $region26: #{tpu_custom_call.1} parent=23 // pred_check_branch
          %187 = sbr.rel (%p185) target = $region28
        $region27: #{tpu_custom_call.1} parent=23 // pred_region
          %s188 = sand.u32 %s30, 1
          %s189 = scalar_lea.sflag [#allocation3], %s188
          %s190 = sand.u32 %s30, 1
          %s191 = smul.addr %s190, 64
          %s192 = scalar_lea.vmem [#allocation2], %s191
          %s193 = smul.u32 16, %s20
          %s195 = ssub.s32 1024, 1024
          %196 = vsyncadd %s189, %s195
          %s197 = smul.addr %s193, 64
          %s198 = scalar_lea.hbm %s0, %s197
          %s199 = sshll.u32 %s192, 4
          %s200 = int_to_ptr.vmem [resolvable:$true] %s199
          %205 = dma.hbm_to_vmem [thread:$0]  %s198, 1024, %s200, %s189, 64, 64, 4
        $region28: #{tpu_custom_call.1} parent=23 // pred_fallthru
          _
        // Predicated region
        $region29: #{tpu_custom_call.1} parent=23 // pred_check
          %p206 = pneg %p66
        $region30: #{tpu_custom_call.1} parent=23 // pred_check_branch
          %208 = sbr.rel (%p206) target = $region32
        $region31: #{tpu_custom_call.1} parent=23 // pred_region
          %s209 = sand.u32 %s20, 1
          %s210 = scalar_lea.sflag [#allocation6], %s209
          %s211 = sand.u32 %s56, 1
          %s212 = smul.addr %s211, 512
          %s213 = scalar_lea.vmem [#allocation5], %s212
          %s214 = smul.u32 128, %s20
          %s216 = ssub.s32 8192, 8192
          %217 = vsyncadd %s210, %s216
          %s218 = smul.addr %s214, 64
          %s219 = scalar_lea.hbm %s1, %s218
          %s220 = sshll.u32 %s213, 4
          %s221 = int_to_ptr.vmem [resolvable:$true] %s220
          %226 = dma.hbm_to_vmem [thread:$0]  %s219, 8192, %s221, %s210, 64, 64, 4
        $region32: #{tpu_custom_call.1} parent=23 // pred_fallthru
          _
      $region24: #{tpu_custom_call.1} parent=5 // pred_fallthru
        _
      %p227 = scmp.le.s32.totalorder 1, %s20
      %p228 = scmp.lt.s32.totalorder %s20, 3
      %p229 = pnand %p227, %p228
      %p230 = pneg %p229
      // Predicated region
      $region33: #{tpu_custom_call.1} parent=5 // pred_check
        _
      $region34: #{tpu_custom_call.1} parent=5 // pred_check_branch
        %232 = sbr.rel (%p229) target = $region36
      $region35: #{tpu_custom_call.1} parent=5 // pred_region
        %s233 = ssub.s32 %s20, 1
        %s234 = sand.u32 %s33, 1
        %s235 = scalar_lea.sflag [#allocation3], %s234
        %s236 = sand.u32 %s33, 1
        %s237 = smul.addr %s236, 64
        %s238 = scalar_lea.vmem [#allocation2], %s237
        // Predicated region
        $region37: #{tpu_custom_call.1} parent=35 // pred_check
          %p239 = pneg %p46
        $region38: #{tpu_custom_call.1} parent=35 // pred_check_branch
          %241 = sbr.rel (%p239) target = $region40
        $region39: #{tpu_custom_call.1} parent=35 // pred_region
          %242 = dma.done %s235, 1024
        $region40: #{tpu_custom_call.1} parent=35 // pred_fallthru
          _
        %s243 = sand.u32 %s25, 1
        %s244 = scalar_lea.sflag [#allocation6], %s243
        %s245 = sand.u32 %s59, 1
        %s246 = smul.addr %s245, 512
        %s247 = scalar_lea.vmem [#allocation5], %s246
        // Predicated region
        $region41: #{tpu_custom_call.1} parent=35 // pred_check
          %p248 = pneg %p72
        $region42: #{tpu_custom_call.1} parent=35 // pred_check_branch
          %250 = sbr.rel (%p248) target = $region44
        $region43: #{tpu_custom_call.1} parent=35 // pred_region
          %251 = dma.done %s244, 8192
        $region44: #{tpu_custom_call.1} parent=35 // pred_fallthru
          _
        // Predicated region
        $region45: #{tpu_custom_call.1} parent=35 // pred_check
          %p252 = pneg %p93
        $region46: #{tpu_custom_call.1} parent=35 // pred_check_branch
          %254 = sbr.rel (%p252) target = $region48
        $region47: #{tpu_custom_call.1} parent=35 // pred_region
          %255 = dma.done [#allocation6], 2048
        $region48: #{tpu_custom_call.1} parent=35 // pred_fallthru
          _
        // Predicated region
        $region49: #{tpu_custom_call.1} parent=35 // pred_check
          %p256 = pneg %p114
        $region50: #{tpu_custom_call.1} parent=35 // pred_check_branch
          %258 = sbr.rel (%p256) target = $region52
        $region51: #{tpu_custom_call.1} parent=35 // pred_region
          %259 = dma.done [#allocation9], 2048
        $region52: #{tpu_custom_call.1} parent=35 // pred_fallthru
          _
        %s260 = sand.u32 %s33, 1
        %s261 = scalar_lea.sflag [#allocation3], %s260
        %s262 = sand.u32 %s33, 1
        %s263 = smul.addr %s262, 64
        %s264 = scalar_lea.vmem [#allocation2], %s263
        %p265 = pneg %p46
        %p266 = pneg %p43
        %s267 = sand.u32 %s25, 1
        %s268 = scalar_lea.sflag [#allocation6], %s267
        %s269 = sand.u32 %s59, 1
        %s270 = smul.addr %s269, 512
        %s271 = scalar_lea.vmem [#allocation5], %s270
        %p272 = pneg %p72
        %p273 = pneg %p69
        %p274 = pneg %p93
        %p275 = pneg %p90
        %p276 = pneg %p114
        %p277 = pneg %p111
        %p278 = pneg %p140
        %p279 = pneg %p137
        %s280 = sand.u32 %s127, 1
        %s281 = scalar_lea.sflag [#allocation4], %s280
        %s282 = sand.u32 %s127, 1
        %s283 = smul.addr %s282, 128
        %s284 = scalar_lea.vmem [#allocation10], %s283
        %s285 = smul.u32 16, %s25
        %s286 = smul.u32 128, %s25
        %s287 = smul.u32 16, %s25
        %v288 = vld [vmem:[%s238] sm:$0xf]
        %v289 = vld [vmem:[%s238 + $0x4] sm:$0xf]
        %v290 = vld [vmem:[%s238 + $0x8] sm:$0xf]
        %v291 = vld [vmem:[%s238 + $0xc] sm:$0xf]
        %v292 = vld [vmem:[%s238 + $0x10] sm:$0xf]
        %v293 = vld [vmem:[%s238 + $0x14] sm:$0xf]
        %v294 = vld [vmem:[%s238 + $0x18] sm:$0xf]
        %v295 = vld [vmem:[%s238 + $0x1c] sm:$0xf]
        %v296 = vld [vmem:[%s238 + $0x20] sm:$0xf]
        %v297 = vld [vmem:[%s238 + $0x24] sm:$0xf]
        %v298 = vld [vmem:[%s238 + $0x28] sm:$0xf]
        %v299 = vld [vmem:[%s238 + $0x2c] sm:$0xf]
        %v300 = vld [vmem:[%s238 + $0x30] sm:$0xf]
        %v301 = vld [vmem:[%s238 + $0x34] sm:$0xf]
        %v302 = vld [vmem:[%s238 + $0x38] sm:$0xf]
        %v303 = vld [vmem:[%s238 + $0x3c] sm:$0xf]
        %v304 = vunpack.c.l.bf16 %v288
        %v305 = vunpack.c.l.bf16 %v289
        %v306 = vunpack.c.l.bf16 %v290
        %v307 = vunpack.c.l.bf16 %v291
        %v308 = vunpack.c.l.bf16 %v292
        %v309 = vunpack.c.l.bf16 %v293
        %v310 = vunpack.c.l.bf16 %v294
        %v311 = vunpack.c.l.bf16 %v295
        %v312 = vunpack.c.l.bf16 %v296
        %v313 = vunpack.c.l.bf16 %v297
        %v314 = vunpack.c.l.bf16 %v298
        %v315 = vunpack.c.l.bf16 %v299
        %v316 = vunpack.c.l.bf16 %v300
        %v317 = vunpack.c.l.bf16 %v301
        %v318 = vunpack.c.l.bf16 %v302
        %v319 = vunpack.c.l.bf16 %v303
        %v320 = vld [vmem:[%s247] sm:$0xf]
        %v321 = vld [vmem:[%s247 + $0x4] sm:$0xf]
        %v322 = vld [vmem:[%s247 + $0x8] sm:$0xf]
        %v323 = vld [vmem:[%s247 + $0xc] sm:$0xf]
        %v324 = vld [vmem:[%s247 + $0x10] sm:$0xf]
        %v325 = vld [vmem:[%s247 + $0x14] sm:$0xf]
        %v326 = vld [vmem:[%s247 + $0x18] sm:$0xf]
        %v327 = vld [vmem:[%s247 + $0x1c] sm:$0xf]
        %v328 = vld [vmem:[%s247 + $0x20] sm:$0xf]
        %v329 = vld [vmem:[%s247 + $0x24] sm:$0xf]
        %v330 = vld [vmem:[%s247 + $0x28] sm:$0xf]
        %v331 = vld [vmem:[%s247 + $0x2c] sm:$0xf]
        %v332 = vld [vmem:[%s247 + $0x30] sm:$0xf]
        %v333 = vld [vmem:[%s247 + $0x34] sm:$0xf]
        %v334 = vld [vmem:[%s247 + $0x38] sm:$0xf]
        %v335 = vld [vmem:[%s247 + $0x3c] sm:$0xf]
        %v336 = vld [vmem:[%s247 + $0x40] sm:$0xf]
        %v337 = vld [vmem:[%s247 + $0x44] sm:$0xf]
        %v338 = vld [vmem:[%s247 + $0x48] sm:$0xf]
        %v339 = vld [vmem:[%s247 + $0x4c] sm:$0xf]
        %v340 = vld [vmem:[%s247 + $0x50] sm:$0xf]
        %v341 = vld [vmem:[%s247 + $0x54] sm:$0xf]
        %v342 = vld [vmem:[%s247 + $0x58] sm:$0xf]
        %v343 = vld [vmem:[%s247 + $0x5c] sm:$0xf]
        %v344 = vld [vmem:[%s247 + $0x60] sm:$0xf]
        %v345 = vld [vmem:[%s247 + $0x64] sm:$0xf]
        %v346 = vld [vmem:[%s247 + $0x68] sm:$0xf]
        %v347 = vld [vmem:[%s247 + $0x6c] sm:$0xf]
        %v348 = vld [vmem:[%s247 + $0x70] sm:$0xf]
        %v349 = vld [vmem:[%s247 + $0x74] sm:$0xf]
        %v350 = vld [vmem:[%s247 + $0x78] sm:$0xf]
        %v351 = vld [vmem:[%s247 + $0x7c] sm:$0xf]
        %v352 = vld [vmem:[%s247 + $0x80] sm:$0xf]
        %v353 = vld [vmem:[%s247 + $0x84] sm:$0xf]
        %v354 = vld [vmem:[%s247 + $0x88] sm:$0xf]
        %v355 = vld [vmem:[%s247 + $0x8c] sm:$0xf]
        %v356 = vld [vmem:[%s247 + $0x90] sm:$0xf]
        %v357 = vld [vmem:[%s247 + $0x94] sm:$0xf]
        %v358 = vld [vmem:[%s247 + $0x98] sm:$0xf]
        %v359 = vld [vmem:[%s247 + $0x9c] sm:$0xf]
        %v360 = vld [vmem:[%s247 + $0xa0] sm:$0xf]
        %v361 = vld [vmem:[%s247 + $0xa4] sm:$0xf]
        %v362 = vld [vmem:[%s247 + $0xa8] sm:$0xf]
        %v363 = vld [vmem:[%s247 + $0xac] sm:$0xf]
        %v364 = vld [vmem:[%s247 + $0xb0] sm:$0xf]
        %v365 = vld [vmem:[%s247 + $0xb4] sm:$0xf]
        %v366 = vld [vmem:[%s247 + $0xb8] sm:$0xf]
        %v367 = vld [vmem:[%s247 + $0xbc] sm:$0xf]
        %v368 = vld [vmem:[%s247 + $0xc0] sm:$0xf]
        %v369 = vld [vmem:[%s247 + $0xc4] sm:$0xf]
        %v370 = vld [vmem:[%s247 + $0xc8] sm:$0xf]
        %v371 = vld [vmem:[%s247 + $0xcc] sm:$0xf]
        %v372 = vld [vmem:[%s247 + $0xd0] sm:$0xf]
        %v373 = vld [vmem:[%s247 + $0xd4] sm:$0xf]
        %v374 = vld [vmem:[%s247 + $0xd8] sm:$0xf]
        %v375 = vld [vmem:[%s247 + $0xdc] sm:$0xf]
        %v376 = vld [vmem:[%s247 + $0xe0] sm:$0xf]
        %v377 = vld [vmem:[%s247 + $0xe4] sm:$0xf]
        %v378 = vld [vmem:[%s247 + $0xe8] sm:$0xf]
        %v379 = vld [vmem:[%s247 + $0xec] sm:$0xf]
        %v380 = vld [vmem:[%s247 + $0xf0] sm:$0xf]
        %v381 = vld [vmem:[%s247 + $0xf4] sm:$0xf]
        %v382 = vld [vmem:[%s247 + $0xf8] sm:$0xf]
        %v383 = vld [vmem:[%s247 + $0xfc] sm:$0xf]
        %v384 = vld [vmem:[%s247 + $0x100] sm:$0xf]
        %v385 = vld [vmem:[%s247 + $0x104] sm:$0xf]
        %v386 = vld [vmem:[%s247 + $0x108] sm:$0xf]
        %v387 = vld [vmem:[%s247 + $0x10c] sm:$0xf]
        %v388 = vld [vmem:[%s247 + $0x110] sm:$0xf]
        %v389 = vld [vmem:[%s247 + $0x114] sm:$0xf]
        %v390 = vld [vmem:[%s247 + $0x118] sm:$0xf]
        %v391 = vld [vmem:[%s247 + $0x11c] sm:$0xf]
        %v392 = vld [vmem:[%s247 + $0x120] sm:$0xf]
        %v393 = vld [vmem:[%s247 + $0x124] sm:$0xf]
        %v394 = vld [vmem:[%s247 + $0x128] sm:$0xf]
        %v395 = vld [vmem:[%s247 + $0x12c] sm:$0xf]
        %v396 = vld [vmem:[%s247 + $0x130] sm:$0xf]
        %v397 = vld [vmem:[%s247 + $0x134] sm:$0xf]
        %v398 = vld [vmem:[%s247 + $0x138] sm:$0xf]
        %v399 = vld [vmem:[%s247 + $0x13c] sm:$0xf]
        %v400 = vld [vmem:[%s247 + $0x140] sm:$0xf]
        %v401 = vld [vmem:[%s247 + $0x144] sm:$0xf]
        %v402 = vld [vmem:[%s247 + $0x148] sm:$0xf]
        %v403 = vld [vmem:[%s247 + $0x14c] sm:$0xf]
        %v404 = vld [vmem:[%s247 + $0x150] sm:$0xf]
        %v405 = vld [vmem:[%s247 + $0x154] sm:$0xf]
        %v406 = vld [vmem:[%s247 + $0x158] sm:$0xf]
        %v407 = vld [vmem:[%s247 + $0x15c] sm:$0xf]
        %v408 = vld [vmem:[%s247 + $0x160] sm:$0xf]
        %v409 = vld [vmem:[%s247 + $0x164] sm:$0xf]
        %v410 = vld [vmem:[%s247 + $0x168] sm:$0xf]
        %v411 = vld [vmem:[%s247 + $0x16c] sm:$0xf]
        %v412 = vld [vmem:[%s247 + $0x170] sm:$0xf]
        %v413 = vld [vmem:[%s247 + $0x174] sm:$0xf]
        %v414 = vld [vmem:[%s247 + $0x178] sm:$0xf]
        %v415 = vld [vmem:[%s247 + $0x17c] sm:$0xf]
        %v416 = vld [vmem:[%s247 + $0x180] sm:$0xf]
        %v417 = vld [vmem:[%s247 + $0x184] sm:$0xf]
        %v418 = vld [vmem:[%s247 + $0x188] sm:$0xf]
        %v419 = vld [vmem:[%s247 + $0x18c] sm:$0xf]
        %v420 = vld [vmem:[%s247 + $0x190] sm:$0xf]
        %v421 = vld [vmem:[%s247 + $0x194] sm:$0xf]
        %v422 = vld [vmem:[%s247 + $0x198] sm:$0xf]
        %v423 = vld [vmem:[%s247 + $0x19c] sm:$0xf]
        %v424 = vld [vmem:[%s247 + $0x1a0] sm:$0xf]
        %v425 = vld [vmem:[%s247 + $0x1a4] sm:$0xf]
        %v426 = vld [vmem:[%s247 + $0x1a8] sm:$0xf]
        %v427 = vld [vmem:[%s247 + $0x1ac] sm:$0xf]
        %v428 = vld [vmem:[%s247 + $0x1b0] sm:$0xf]
        %v429 = vld [vmem:[%s247 + $0x1b4] sm:$0xf]
        %v430 = vld [vmem:[%s247 + $0x1b8] sm:$0xf]
        %v431 = vld [vmem:[%s247 + $0x1bc] sm:$0xf]
        %v432 = vld [vmem:[%s247 + $0x1c0] sm:$0xf]
        %v433 = vld [vmem:[%s247 + $0x1c4] sm:$0xf]
        %v434 = vld [vmem:[%s247 + $0x1c8] sm:$0xf]
        %v435 = vld [vmem:[%s247 + $0x1cc] sm:$0xf]
        %v436 = vld [vmem:[%s247 + $0x1d0] sm:$0xf]
        %v437 = vld [vmem:[%s247 + $0x1d4] sm:$0xf]
        %v438 = vld [vmem:[%s247 + $0x1d8] sm:$0xf]
        %v439 = vld [vmem:[%s247 + $0x1dc] sm:$0xf]
        %v440 = vld [vmem:[%s247 + $0x1e0] sm:$0xf]
        %v441 = vld [vmem:[%s247 + $0x1e4] sm:$0xf]
        %v442 = vld [vmem:[%s247 + $0x1e8] sm:$0xf]
        %v443 = vld [vmem:[%s247 + $0x1ec] sm:$0xf]
        %v444 = vld [vmem:[%s247 + $0x1f0] sm:$0xf]
        %v445 = vld [vmem:[%s247 + $0x1f4] sm:$0xf]
        %v446 = vld [vmem:[%s247 + $0x1f8] sm:$0xf]
        %v447 = vld [vmem:[%s247 + $0x1fc] sm:$0xf]
        %v448 = vunpack.c.l.bf16 %v320
        %v449 = vunpack.c.l.bf16 %v321
        %v450 = vunpack.c.l.bf16 %v322
        %v451 = vunpack.c.l.bf16 %v323
        %v452 = vunpack.c.l.bf16 %v324
        %v453 = vunpack.c.l.bf16 %v325
        %v454 = vunpack.c.l.bf16 %v326
        %v455 = vunpack.c.l.bf16 %v327
        %v456 = vunpack.c.l.bf16 %v328
        %v457 = vunpack.c.l.bf16 %v329
        %v458 = vunpack.c.l.bf16 %v330
        %v459 = vunpack.c.l.bf16 %v331
        %v460 = vunpack.c.l.bf16 %v332
        %v461 = vunpack.c.l.bf16 %v333
        %v462 = vunpack.c.l.bf16 %v334
        %v463 = vunpack.c.l.bf16 %v335
        %v464 = vunpack.c.l.bf16 %v336
        %v465 = vunpack.c.l.bf16 %v337
        %v466 = vunpack.c.l.bf16 %v338
        %v467 = vunpack.c.l.bf16 %v339
        %v468 = vunpack.c.l.bf16 %v340
        %v469 = vunpack.c.l.bf16 %v341
        %v470 = vunpack.c.l.bf16 %v342
        %v471 = vunpack.c.l.bf16 %v343
        %v472 = vunpack.c.l.bf16 %v344
        %v473 = vunpack.c.l.bf16 %v345
        %v474 = vunpack.c.l.bf16 %v346
        %v475 = vunpack.c.l.bf16 %v347
        %v476 = vunpack.c.l.bf16 %v348
        %v477 = vunpack.c.l.bf16 %v349
        %v478 = vunpack.c.l.bf16 %v350
        %v479 = vunpack.c.l.bf16 %v351
        %v480 = vunpack.c.l.bf16 %v352
        %v481 = vunpack.c.l.bf16 %v353
        %v482 = vunpack.c.l.bf16 %v354
        %v483 = vunpack.c.l.bf16 %v355
        %v484 = vunpack.c.l.bf16 %v356
        %v485 = vunpack.c.l.bf16 %v357
        %v486 = vunpack.c.l.bf16 %v358
        %v487 = vunpack.c.l.bf16 %v359
        %v488 = vunpack.c.l.bf16 %v360
        %v489 = vunpack.c.l.bf16 %v361
        %v490 = vunpack.c.l.bf16 %v362
        %v491 = vunpack.c.l.bf16 %v363
        %v492 = vunpack.c.l.bf16 %v364
        %v493 = vunpack.c.l.bf16 %v365
        %v494 = vunpack.c.l.bf16 %v366
        %v495 = vunpack.c.l.bf16 %v367
        %v496 = vunpack.c.l.bf16 %v368
        %v497 = vunpack.c.l.bf16 %v369
        %v498 = vunpack.c.l.bf16 %v370
        %v499 = vunpack.c.l.bf16 %v371
        %v500 = vunpack.c.l.bf16 %v372
        %v501 = vunpack.c.l.bf16 %v373
        %v502 = vunpack.c.l.bf16 %v374
        %v503 = vunpack.c.l.bf16 %v375
        %v504 = vunpack.c.l.bf16 %v376
        %v505 = vunpack.c.l.bf16 %v377
        %v506 = vunpack.c.l.bf16 %v378
        %v507 = vunpack.c.l.bf16 %v379
        %v508 = vunpack.c.l.bf16 %v380
        %v509 = vunpack.c.l.bf16 %v381
        %v510 = vunpack.c.l.bf16 %v382
        %v511 = vunpack.c.l.bf16 %v383
        %v512 = vunpack.c.l.bf16 %v384
        %v513 = vunpack.c.l.bf16 %v385
        %v514 = vunpack.c.l.bf16 %v386
        %v515 = vunpack.c.l.bf16 %v387
        %v516 = vunpack.c.l.bf16 %v388
        %v517 = vunpack.c.l.bf16 %v389
        %v518 = vunpack.c.l.bf16 %v390
        %v519 = vunpack.c.l.bf16 %v391
        %v520 = vunpack.c.l.bf16 %v392
        %v521 = vunpack.c.l.bf16 %v393
        %v522 = vunpack.c.l.bf16 %v394
        %v523 = vunpack.c.l.bf16 %v395
        %v524 = vunpack.c.l.bf16 %v396
        %v525 = vunpack.c.l.bf16 %v397
        %v526 = vunpack.c.l.bf16 %v398
        %v527 = vunpack.c.l.bf16 %v399
        %v528 = vunpack.c.l.bf16 %v400
        %v529 = vunpack.c.l.bf16 %v401
        %v530 = vunpack.c.l.bf16 %v402
        %v531 = vunpack.c.l.bf16 %v403
        %v532 = vunpack.c.l.bf16 %v404
        %v533 = vunpack.c.l.bf16 %v405
        %v534 = vunpack.c.l.bf16 %v406
        %v535 = vunpack.c.l.bf16 %v407
        %v536 = vunpack.c.l.bf16 %v408
        %v537 = vunpack.c.l.bf16 %v409
        %v538 = vunpack.c.l.bf16 %v410
        %v539 = vunpack.c.l.bf16 %v411
        %v540 = vunpack.c.l.bf16 %v412
        %v541 = vunpack.c.l.bf16 %v413
        %v542 = vunpack.c.l.bf16 %v414
        %v543 = vunpack.c.l.bf16 %v415
        %v544 = vunpack.c.l.bf16 %v416
        %v545 = vunpack.c.l.bf16 %v417
        %v546 = vunpack.c.l.bf16 %v418
        %v547 = vunpack.c.l.bf16 %v419
        %v548 = vunpack.c.l.bf16 %v420
        %v549 = vunpack.c.l.bf16 %v421
        %v550 = vunpack.c.l.bf16 %v422
        %v551 = vunpack.c.l.bf16 %v423
        %v552 = vunpack.c.l.bf16 %v424
        %v553 = vunpack.c.l.bf16 %v425
        %v554 = vunpack.c.l.bf16 %v426
        %v555 = vunpack.c.l.bf16 %v427
        %v556 = vunpack.c.l.bf16 %v428
        %v557 = vunpack.c.l.bf16 %v429
        %v558 = vunpack.c.l.bf16 %v430
        %v559 = vunpack.c.l.bf16 %v431
        %v560 = vunpack.c.l.bf16 %v432
        %v561 = vunpack.c.l.bf16 %v433
        %v562 = vunpack.c.l.bf16 %v434
        %v563 = vunpack.c.l.bf16 %v435
        %v564 = vunpack.c.l.bf16 %v436
        %v565 = vunpack.c.l.bf16 %v437
        %v566 = vunpack.c.l.bf16 %v438
        %v567 = vunpack.c.l.bf16 %v439
        %v568 = vunpack.c.l.bf16 %v440
        %v569 = vunpack.c.l.bf16 %v441
        %v570 = vunpack.c.l.bf16 %v442
        %v571 = vunpack.c.l.bf16 %v443
        %v572 = vunpack.c.l.bf16 %v444
        %v573 = vunpack.c.l.bf16 %v445
        %v574 = vunpack.c.l.bf16 %v446
        %v575 = vunpack.c.l.bf16 %v447
        %v576 = vrot.slane %v448, 4
        %v577 = vadd.f32 %v448, %v576
        %v578 = vrot.slane %v577, 2
        %v579 = vadd.f32 %v577, %v578
        %v580 = vrot.slane %v579, 1
        %v581 = vadd.f32 %v579, %v580
        %v582 = vrot.slane %v449, 4
        %v583 = vadd.f32 %v449, %v582
        %v584 = vrot.slane %v583, 2
        %v585 = vadd.f32 %v583, %v584
        %v586 = vrot.slane %v585, 1
        %v587 = vadd.f32 %v585, %v586
        %v588 = vrot.slane %v450, 4
        %v589 = vadd.f32 %v450, %v588
        %v590 = vrot.slane %v589, 2
        %v591 = vadd.f32 %v589, %v590
        %v592 = vrot.slane %v591, 1
        %v593 = vadd.f32 %v591, %v592
        %v594 = vrot.slane %v451, 4
        %v595 = vadd.f32 %v451, %v594
        %v596 = vrot.slane %v595, 2
        %v597 = vadd.f32 %v595, %v596
        %v598 = vrot.slane %v597, 1
        %v599 = vadd.f32 %v597, %v598
        %v600 = vrot.slane %v452, 4
        %v601 = vadd.f32 %v452, %v600
        %v602 = vrot.slane %v601, 2
        %v603 = vadd.f32 %v601, %v602
        %v604 = vrot.slane %v603, 1
        %v605 = vadd.f32 %v603, %v604
        %v606 = vrot.slane %v453, 4
        %v607 = vadd.f32 %v453, %v606
        %v608 = vrot.slane %v607, 2
        %v609 = vadd.f32 %v607, %v608
        %v610 = vrot.slane %v609, 1
        %v611 = vadd.f32 %v609, %v610
        %v612 = vrot.slane %v454, 4
        %v613 = vadd.f32 %v454, %v612
        %v614 = vrot.slane %v613, 2
        %v615 = vadd.f32 %v613, %v614
        %v616 = vrot.slane %v615, 1
        %v617 = vadd.f32 %v615, %v616
        %v618 = vrot.slane %v455, 4
        %v619 = vadd.f32 %v455, %v618
        %v620 = vrot.slane %v619, 2
        %v621 = vadd.f32 %v619, %v620
        %v622 = vrot.slane %v621, 1
        %v623 = vadd.f32 %v621, %v622
        %v624 = vrot.slane %v456, 4
        %v625 = vadd.f32 %v456, %v624
        %v626 = vrot.slane %v625, 2
        %v627 = vadd.f32 %v625, %v626
        %v628 = vrot.slane %v627, 1
        %v629 = vadd.f32 %v627, %v628
        %v630 = vrot.slane %v457, 4
        %v631 = vadd.f32 %v457, %v630
        %v632 = vrot.slane %v631, 2
        %v633 = vadd.f32 %v631, %v632
        %v634 = vrot.slane %v633, 1
        %v635 = vadd.f32 %v633, %v634
        %v636 = vrot.slane %v458, 4
        %v637 = vadd.f32 %v458, %v636
        %v638 = vrot.slane %v637, 2
        %v639 = vadd.f32 %v637, %v638
        %v640 = vrot.slane %v639, 1
        %v641 = vadd.f32 %v639, %v640
        %v642 = vrot.slane %v459, 4
        %v643 = vadd.f32 %v459, %v642
        %v644 = vrot.slane %v643, 2
        %v645 = vadd.f32 %v643, %v644
        %v646 = vrot.slane %v645, 1
        %v647 = vadd.f32 %v645, %v646
        %v648 = vrot.slane %v460, 4
        %v649 = vadd.f32 %v460, %v648
        %v650 = vrot.slane %v649, 2
        %v651 = vadd.f32 %v649, %v650
        %v652 = vrot.slane %v651, 1
        %v653 = vadd.f32 %v651, %v652
        %v654 = vrot.slane %v461, 4
        %v655 = vadd.f32 %v461, %v654
        %v656 = vrot.slane %v655, 2
        %v657 = vadd.f32 %v655, %v656
        %v658 = vrot.slane %v657, 1
        %v659 = vadd.f32 %v657, %v658
        %v660 = vrot.slane %v462, 4
        %v661 = vadd.f32 %v462, %v660
        %v662 = vrot.slane %v661, 2
        %v663 = vadd.f32 %v661, %v662
        %v664 = vrot.slane %v663, 1
        %v665 = vadd.f32 %v663, %v664
        %v666 = vrot.slane %v463, 4
        %v667 = vadd.f32 %v463, %v666
        %v668 = vrot.slane %v667, 2
        %v669 = vadd.f32 %v667, %v668
        %v670 = vrot.slane %v669, 1
        %v671 = vadd.f32 %v669, %v670
        %v672 = vrot.slane %v464, 4
        %v673 = vadd.f32 %v464, %v672
        %v674 = vrot.slane %v673, 2
        %v675 = vadd.f32 %v673, %v674
        %v676 = vrot.slane %v675, 1
        %v677 = vadd.f32 %v675, %v676
        %v678 = vrot.slane %v465, 4
        %v679 = vadd.f32 %v465, %v678
        %v680 = vrot.slane %v679, 2
        %v681 = vadd.f32 %v679, %v680
        %v682 = vrot.slane %v681, 1
        %v683 = vadd.f32 %v681, %v682
        %v684 = vrot.slane %v466, 4
        %v685 = vadd.f32 %v466, %v684
        %v686 = vrot.slane %v685, 2
        %v687 = vadd.f32 %v685, %v686
        %v688 = vrot.slane %v687, 1
        %v689 = vadd.f32 %v687, %v688
        %v690 = vrot.slane %v467, 4
        %v691 = vadd.f32 %v467, %v690
        %v692 = vrot.slane %v691, 2
        %v693 = vadd.f32 %v691, %v692
        %v694 = vrot.slane %v693, 1
        %v695 = vadd.f32 %v693, %v694
        %v696 = vrot.slane %v468, 4
        %v697 = vadd.f32 %v468, %v696
        %v698 = vrot.slane %v697, 2
        %v699 = vadd.f32 %v697, %v698
        %v700 = vrot.slane %v699, 1
        %v701 = vadd.f32 %v699, %v700
        %v702 = vrot.slane %v469, 4
        %v703 = vadd.f32 %v469, %v702
        %v704 = vrot.slane %v703, 2
        %v705 = vadd.f32 %v703, %v704
        %v706 = vrot.slane %v705, 1
        %v707 = vadd.f32 %v705, %v706
        %v708 = vrot.slane %v470, 4
        %v709 = vadd.f32 %v470, %v708
        %v710 = vrot.slane %v709, 2
        %v711 = vadd.f32 %v709, %v710
        %v712 = vrot.slane %v711, 1
        %v713 = vadd.f32 %v711, %v712
        %v714 = vrot.slane %v471, 4
        %v715 = vadd.f32 %v471, %v714
        %v716 = vrot.slane %v715, 2
        %v717 = vadd.f32 %v715, %v716
        %v718 = vrot.slane %v717, 1
        %v719 = vadd.f32 %v717, %v718
        %v720 = vrot.slane %v472, 4
        %v721 = vadd.f32 %v472, %v720
        %v722 = vrot.slane %v721, 2
        %v723 = vadd.f32 %v721, %v722
        %v724 = vrot.slane %v723, 1
        %v725 = vadd.f32 %v723, %v724
        %v726 = vrot.slane %v473, 4
        %v727 = vadd.f32 %v473, %v726
        %v728 = vrot.slane %v727, 2
        %v729 = vadd.f32 %v727, %v728
        %v730 = vrot.slane %v729, 1
        %v731 = vadd.f32 %v729, %v730
        %v732 = vrot.slane %v474, 4
        %v733 = vadd.f32 %v474, %v732
        %v734 = vrot.slane %v733, 2
        %v735 = vadd.f32 %v733, %v734
        %v736 = vrot.slane %v735, 1
        %v737 = vadd.f32 %v735, %v736
        %v738 = vrot.slane %v475, 4
        %v739 = vadd.f32 %v475, %v738
        %v740 = vrot.slane %v739, 2
        %v741 = vadd.f32 %v739, %v740
        %v742 = vrot.slane %v741, 1
        %v743 = vadd.f32 %v741, %v742
        %v744 = vrot.slane %v476, 4
        %v745 = vadd.f32 %v476, %v744
        %v746 = vrot.slane %v745, 2
        %v747 = vadd.f32 %v745, %v746
        %v748 = vrot.slane %v747, 1
        %v749 = vadd.f32 %v747, %v748
        %v750 = vrot.slane %v477, 4
        %v751 = vadd.f32 %v477, %v750
        %v752 = vrot.slane %v751, 2
        %v753 = vadd.f32 %v751, %v752
        %v754 = vrot.slane %v753, 1
        %v755 = vadd.f32 %v753, %v754
        %v756 = vrot.slane %v478, 4
        %v757 = vadd.f32 %v478, %v756
        %v758 = vrot.slane %v757, 2
        %v759 = vadd.f32 %v757, %v758
        %v760 = vrot.slane %v759, 1
        %v761 = vadd.f32 %v759, %v760
        %v762 = vrot.slane %v479, 4
        %v763 = vadd.f32 %v479, %v762
        %v764 = vrot.slane %v763, 2
        %v765 = vadd.f32 %v763, %v764
        %v766 = vrot.slane %v765, 1
        %v767 = vadd.f32 %v765, %v766
        %v768 = vrot.slane %v480, 4
        %v769 = vadd.f32 %v480, %v768
        %v770 = vrot.slane %v769, 2
        %v771 = vadd.f32 %v769, %v770
        %v772 = vrot.slane %v771, 1
        %v773 = vadd.f32 %v771, %v772
        %v774 = vrot.slane %v481, 4
        %v775 = vadd.f32 %v481, %v774
        %v776 = vrot.slane %v775, 2
        %v777 = vadd.f32 %v775, %v776
        %v778 = vrot.slane %v777, 1
        %v779 = vadd.f32 %v777, %v778
        %v780 = vrot.slane %v482, 4
        %v781 = vadd.f32 %v482, %v780
        %v782 = vrot.slane %v781, 2
        %v783 = vadd.f32 %v781, %v782
        %v784 = vrot.slane %v783, 1
        %v785 = vadd.f32 %v783, %v784
        %v786 = vrot.slane %v483, 4
        %v787 = vadd.f32 %v483, %v786
        %v788 = vrot.slane %v787, 2
        %v789 = vadd.f32 %v787, %v788
        %v790 = vrot.slane %v789, 1
        %v791 = vadd.f32 %v789, %v790
        %v792 = vrot.slane %v484, 4
        %v793 = vadd.f32 %v484, %v792
        %v794 = vrot.slane %v793, 2
        %v795 = vadd.f32 %v793, %v794
        %v796 = vrot.slane %v795, 1
        %v797 = vadd.f32 %v795, %v796
        %v798 = vrot.slane %v485, 4
        %v799 = vadd.f32 %v485, %v798
        %v800 = vrot.slane %v799, 2
        %v801 = vadd.f32 %v799, %v800
        %v802 = vrot.slane %v801, 1
        %v803 = vadd.f32 %v801, %v802
        %v804 = vrot.slane %v486, 4
        %v805 = vadd.f32 %v486, %v804
        %v806 = vrot.slane %v805, 2
        %v807 = vadd.f32 %v805, %v806
        %v808 = vrot.slane %v807, 1
        %v809 = vadd.f32 %v807, %v808
        %v810 = vrot.slane %v487, 4
        %v811 = vadd.f32 %v487, %v810
        %v812 = vrot.slane %v811, 2
        %v813 = vadd.f32 %v811, %v812
        %v814 = vrot.slane %v813, 1
        %v815 = vadd.f32 %v813, %v814
        %v816 = vrot.slane %v488, 4
        %v817 = vadd.f32 %v488, %v816
        %v818 = vrot.slane %v817, 2
        %v819 = vadd.f32 %v817, %v818
        %v820 = vrot.slane %v819, 1
        %v821 = vadd.f32 %v819, %v820
        %v822 = vrot.slane %v489, 4
        %v823 = vadd.f32 %v489, %v822
        %v824 = vrot.slane %v823, 2
        %v825 = vadd.f32 %v823, %v824
        %v826 = vrot.slane %v825, 1
        %v827 = vadd.f32 %v825, %v826
        %v828 = vrot.slane %v490, 4
        %v829 = vadd.f32 %v490, %v828
        %v830 = vrot.slane %v829, 2
        %v831 = vadd.f32 %v829, %v830
        %v832 = vrot.slane %v831, 1
        %v833 = vadd.f32 %v831, %v832
        %v834 = vrot.slane %v491, 4
        %v835 = vadd.f32 %v491, %v834
        %v836 = vrot.slane %v835, 2
        %v837 = vadd.f32 %v835, %v836
        %v838 = vrot.slane %v837, 1
        %v839 = vadd.f32 %v837, %v838
        %v840 = vrot.slane %v492, 4
        %v841 = vadd.f32 %v492, %v840
        %v842 = vrot.slane %v841, 2
        %v843 = vadd.f32 %v841, %v842
        %v844 = vrot.slane %v843, 1
        %v845 = vadd.f32 %v843, %v844
        %v846 = vrot.slane %v493, 4
        %v847 = vadd.f32 %v493, %v846
        %v848 = vrot.slane %v847, 2
        %v849 = vadd.f32 %v847, %v848
        %v850 = vrot.slane %v849, 1
        %v851 = vadd.f32 %v849, %v850
        %v852 = vrot.slane %v494, 4
        %v853 = vadd.f32 %v494, %v852
        %v854 = vrot.slane %v853, 2
        %v855 = vadd.f32 %v853, %v854
        %v856 = vrot.slane %v855, 1
        %v857 = vadd.f32 %v855, %v856
        %v858 = vrot.slane %v495, 4
        %v859 = vadd.f32 %v495, %v858
        %v860 = vrot.slane %v859, 2
        %v861 = vadd.f32 %v859, %v860
        %v862 = vrot.slane %v861, 1
        %v863 = vadd.f32 %v861, %v862
        %v864 = vrot.slane %v496, 4
        %v865 = vadd.f32 %v496, %v864
        %v866 = vrot.slane %v865, 2
        %v867 = vadd.f32 %v865, %v866
        %v868 = vrot.slane %v867, 1
        %v869 = vadd.f32 %v867, %v868
        %v870 = vrot.slane %v497, 4
        %v871 = vadd.f32 %v497, %v870
        %v872 = vrot.slane %v871, 2
        %v873 = vadd.f32 %v871, %v872
        %v874 = vrot.slane %v873, 1
        %v875 = vadd.f32 %v873, %v874
        %v876 = vrot.slane %v498, 4
        %v877 = vadd.f32 %v498, %v876
        %v878 = vrot.slane %v877, 2
        %v879 = vadd.f32 %v877, %v878
        %v880 = vrot.slane %v879, 1
        %v881 = vadd.f32 %v879, %v880
        %v882 = vrot.slane %v499, 4
        %v883 = vadd.f32 %v499, %v882
        %v884 = vrot.slane %v883, 2
        %v885 = vadd.f32 %v883, %v884
        %v886 = vrot.slane %v885, 1
        %v887 = vadd.f32 %v885, %v886
        %v888 = vrot.slane %v500, 4
        %v889 = vadd.f32 %v500, %v888
        %v890 = vrot.slane %v889, 2
        %v891 = vadd.f32 %v889, %v890
        %v892 = vrot.slane %v891, 1
        %v893 = vadd.f32 %v891, %v892
        %v894 = vrot.slane %v501, 4
        %v895 = vadd.f32 %v501, %v894
        %v896 = vrot.slane %v895, 2
        %v897 = vadd.f32 %v895, %v896
        %v898 = vrot.slane %v897, 1
        %v899 = vadd.f32 %v897, %v898
        %v900 = vrot.slane %v502, 4
        %v901 = vadd.f32 %v502, %v900
        %v902 = vrot.slane %v901, 2
        %v903 = vadd.f32 %v901, %v902
        %v904 = vrot.slane %v903, 1
        %v905 = vadd.f32 %v903, %v904
        %v906 = vrot.slane %v503, 4
        %v907 = vadd.f32 %v503, %v906
        %v908 = vrot.slane %v907, 2
        %v909 = vadd.f32 %v907, %v908
        %v910 = vrot.slane %v909, 1
        %v911 = vadd.f32 %v909, %v910
        %v912 = vrot.slane %v504, 4
        %v913 = vadd.f32 %v504, %v912
        %v914 = vrot.slane %v913, 2
        %v915 = vadd.f32 %v913, %v914
        %v916 = vrot.slane %v915, 1
        %v917 = vadd.f32 %v915, %v916
        %v918 = vrot.slane %v505, 4
        %v919 = vadd.f32 %v505, %v918
        %v920 = vrot.slane %v919, 2
        %v921 = vadd.f32 %v919, %v920
        %v922 = vrot.slane %v921, 1
        %v923 = vadd.f32 %v921, %v922
        %v924 = vrot.slane %v506, 4
        %v925 = vadd.f32 %v506, %v924
        %v926 = vrot.slane %v925, 2
        %v927 = vadd.f32 %v925, %v926
        %v928 = vrot.slane %v927, 1
        %v929 = vadd.f32 %v927, %v928
        %v930 = vrot.slane %v507, 4
        %v931 = vadd.f32 %v507, %v930
        %v932 = vrot.slane %v931, 2
        %v933 = vadd.f32 %v931, %v932
        %v934 = vrot.slane %v933, 1
        %v935 = vadd.f32 %v933, %v934
        %v936 = vrot.slane %v508, 4
        %v937 = vadd.f32 %v508, %v936
        %v938 = vrot.slane %v937, 2
        %v939 = vadd.f32 %v937, %v938
        %v940 = vrot.slane %v939, 1
        %v941 = vadd.f32 %v939, %v940
        %v942 = vrot.slane %v509, 4
        %v943 = vadd.f32 %v509, %v942
        %v944 = vrot.slane %v943, 2
        %v945 = vadd.f32 %v943, %v944
        %v946 = vrot.slane %v945, 1
        %v947 = vadd.f32 %v945, %v946
        %v948 = vrot.slane %v510, 4
        %v949 = vadd.f32 %v510, %v948
        %v950 = vrot.slane %v949, 2
        %v951 = vadd.f32 %v949, %v950
        %v952 = vrot.slane %v951, 1
        %v953 = vadd.f32 %v951, %v952
        %v954 = vrot.slane %v511, 4
        %v955 = vadd.f32 %v511, %v954
        %v956 = vrot.slane %v955, 2
        %v957 = vadd.f32 %v955, %v956
        %v958 = vrot.slane %v957, 1
        %v959 = vadd.f32 %v957, %v958
        %v960 = vrot.slane %v512, 4
        %v961 = vadd.f32 %v512, %v960
        %v962 = vrot.slane %v961, 2
        %v963 = vadd.f32 %v961, %v962
        %v964 = vrot.slane %v963, 1
        %v965 = vadd.f32 %v963, %v964
        %v966 = vrot.slane %v513, 4
        %v967 = vadd.f32 %v513, %v966
        %v968 = vrot.slane %v967, 2
        %v969 = vadd.f32 %v967, %v968
        %v970 = vrot.slane %v969, 1
        %v971 = vadd.f32 %v969, %v970
        %v972 = vrot.slane %v514, 4
        %v973 = vadd.f32 %v514, %v972
        %v974 = vrot.slane %v973, 2
        %v975 = vadd.f32 %v973, %v974
        %v976 = vrot.slane %v975, 1
        %v977 = vadd.f32 %v975, %v976
        %v978 = vrot.slane %v515, 4
        %v979 = vadd.f32 %v515, %v978
        %v980 = vrot.slane %v979, 2
        %v981 = vadd.f32 %v979, %v980
        %v982 = vrot.slane %v981, 1
        %v983 = vadd.f32 %v981, %v982
        %v984 = vrot.slane %v516, 4
        %v985 = vadd.f32 %v516, %v984
        %v986 = vrot.slane %v985, 2
        %v987 = vadd.f32 %v985, %v986
        %v988 = vrot.slane %v987, 1
        %v989 = vadd.f32 %v987, %v988
        %v990 = vrot.slane %v517, 4
        %v991 = vadd.f32 %v517, %v990
        %v992 = vrot.slane %v991, 2
        %v993 = vadd.f32 %v991, %v992
        %v994 = vrot.slane %v993, 1
        %v995 = vadd.f32 %v993, %v994
        %v996 = vrot.slane %v518, 4
        %v997 = vadd.f32 %v518, %v996
        %v998 = vrot.slane %v997, 2
        %v999 = vadd.f32 %v997, %v998
        %v1000 = vrot.slane %v999, 1
        %v1001 = vadd.f32 %v999, %v1000
        %v1002 = vrot.slane %v519, 4
        %v1003 = vadd.f32 %v519, %v1002
        %v1004 = vrot.slane %v1003, 2
        %v1005 = vadd.f32 %v1003, %v1004
        %v1006 = vrot.slane %v1005, 1
        %v1007 = vadd.f32 %v1005, %v1006
        %v1008 = vrot.slane %v520, 4
        %v1009 = vadd.f32 %v520, %v1008
        %v1010 = vrot.slane %v1009, 2
        %v1011 = vadd.f32 %v1009, %v1010
        %v1012 = vrot.slane %v1011, 1
        %v1013 = vadd.f32 %v1011, %v1012
        %v1014 = vrot.slane %v521, 4
        %v1015 = vadd.f32 %v521, %v1014
        %v1016 = vrot.slane %v1015, 2
        %v1017 = vadd.f32 %v1015, %v1016
        %v1018 = vrot.slane %v1017, 1
        %v1019 = vadd.f32 %v1017, %v1018
        %v1020 = vrot.slane %v522, 4
        %v1021 = vadd.f32 %v522, %v1020
        %v1022 = vrot.slane %v1021, 2
        %v1023 = vadd.f32 %v1021, %v1022
        %v1024 = vrot.slane %v1023, 1
        %v1025 = vadd.f32 %v1023, %v1024
        %v1026 = vrot.slane %v523, 4
        %v1027 = vadd.f32 %v523, %v1026
        %v1028 = vrot.slane %v1027, 2
        %v1029 = vadd.f32 %v1027, %v1028
        %v1030 = vrot.slane %v1029, 1
        %v1031 = vadd.f32 %v1029, %v1030
        %v1032 = vrot.slane %v524, 4
        %v1033 = vadd.f32 %v524, %v1032
        %v1034 = vrot.slane %v1033, 2
        %v1035 = vadd.f32 %v1033, %v1034
        %v1036 = vrot.slane %v1035, 1
        %v1037 = vadd.f32 %v1035, %v1036
        %v1038 = vrot.slane %v525, 4
        %v1039 = vadd.f32 %v525, %v1038
        %v1040 = vrot.slane %v1039, 2
        %v1041 = vadd.f32 %v1039, %v1040
        %v1042 = vrot.slane %v1041, 1
        %v1043 = vadd.f32 %v1041, %v1042
        %v1044 = vrot.slane %v526, 4
        %v1045 = vadd.f32 %v526, %v1044
        %v1046 = vrot.slane %v1045, 2
        %v1047 = vadd.f32 %v1045, %v1046
        %v1048 = vrot.slane %v1047, 1
        %v1049 = vadd.f32 %v1047, %v1048
        %v1050 = vrot.slane %v527, 4
        %v1051 = vadd.f32 %v527, %v1050
        %v1052 = vrot.slane %v1051, 2
        %v1053 = vadd.f32 %v1051, %v1052
        %v1054 = vrot.slane %v1053, 1
        %v1055 = vadd.f32 %v1053, %v1054
        %v1056 = vrot.slane %v528, 4
        %v1057 = vadd.f32 %v528, %v1056
        %v1058 = vrot.slane %v1057, 2
        %v1059 = vadd.f32 %v1057, %v1058
        %v1060 = vrot.slane %v1059, 1
        %v1061 = vadd.f32 %v1059, %v1060
        %v1062 = vrot.slane %v529, 4
        %v1063 = vadd.f32 %v529, %v1062
        %v1064 = vrot.slane %v1063, 2
        %v1065 = vadd.f32 %v1063, %v1064
        %v1066 = vrot.slane %v1065, 1
        %v1067 = vadd.f32 %v1065, %v1066
        %v1068 = vrot.slane %v530, 4
        %v1069 = vadd.f32 %v530, %v1068
        %v1070 = vrot.slane %v1069, 2
        %v1071 = vadd.f32 %v1069, %v1070
        %v1072 = vrot.slane %v1071, 1
        %v1073 = vadd.f32 %v1071, %v1072
        %v1074 = vrot.slane %v531, 4
        %v1075 = vadd.f32 %v531, %v1074
        %v1076 = vrot.slane %v1075, 2
        %v1077 = vadd.f32 %v1075, %v1076
        %v1078 = vrot.slane %v1077, 1
        %v1079 = vadd.f32 %v1077, %v1078
        %v1080 = vrot.slane %v532, 4
        %v1081 = vadd.f32 %v532, %v1080
        %v1082 = vrot.slane %v1081, 2
        %v1083 = vadd.f32 %v1081, %v1082
        %v1084 = vrot.slane %v1083, 1
        %v1085 = vadd.f32 %v1083, %v1084
        %v1086 = vrot.slane %v533, 4
        %v1087 = vadd.f32 %v533, %v1086
        %v1088 = vrot.slane %v1087, 2
        %v1089 = vadd.f32 %v1087, %v1088
        %v1090 = vrot.slane %v1089, 1
        %v1091 = vadd.f32 %v1089, %v1090
        %v1092 = vrot.slane %v534, 4
        %v1093 = vadd.f32 %v534, %v1092
        %v1094 = vrot.slane %v1093, 2
        %v1095 = vadd.f32 %v1093, %v1094
        %v1096 = vrot.slane %v1095, 1
        %v1097 = vadd.f32 %v1095, %v1096
        %v1098 = vrot.slane %v535, 4
        %v1099 = vadd.f32 %v535, %v1098
        %v1100 = vrot.slane %v1099, 2
        %v1101 = vadd.f32 %v1099, %v1100
        %v1102 = vrot.slane %v1101, 1
        %v1103 = vadd.f32 %v1101, %v1102
        %v1104 = vrot.slane %v536, 4
        %v1105 = vadd.f32 %v536, %v1104
        %v1106 = vrot.slane %v1105, 2
        %v1107 = vadd.f32 %v1105, %v1106
        %v1108 = vrot.slane %v1107, 1
        %v1109 = vadd.f32 %v1107, %v1108
        %v1110 = vrot.slane %v537, 4
        %v1111 = vadd.f32 %v537, %v1110
        %v1112 = vrot.slane %v1111, 2
        %v1113 = vadd.f32 %v1111, %v1112
        %v1114 = vrot.slane %v1113, 1
        %v1115 = vadd.f32 %v1113, %v1114
        %v1116 = vrot.slane %v538, 4
        %v1117 = vadd.f32 %v538, %v1116
        %v1118 = vrot.slane %v1117, 2
        %v1119 = vadd.f32 %v1117, %v1118
        %v1120 = vrot.slane %v1119, 1
        %v1121 = vadd.f32 %v1119, %v1120
        %v1122 = vrot.slane %v539, 4
        %v1123 = vadd.f32 %v539, %v1122
        %v1124 = vrot.slane %v1123, 2
        %v1125 = vadd.f32 %v1123, %v1124
        %v1126 = vrot.slane %v1125, 1
        %v1127 = vadd.f32 %v1125, %v1126
        %v1128 = vrot.slane %v540, 4
        %v1129 = vadd.f32 %v540, %v1128
        %v1130 = vrot.slane %v1129, 2
        %v1131 = vadd.f32 %v1129, %v1130
        %v1132 = vrot.slane %v1131, 1
        %v1133 = vadd.f32 %v1131, %v1132
        %v1134 = vrot.slane %v541, 4
        %v1135 = vadd.f32 %v541, %v1134
        %v1136 = vrot.slane %v1135, 2
        %v1137 = vadd.f32 %v1135, %v1136
        %v1138 = vrot.slane %v1137, 1
        %v1139 = vadd.f32 %v1137, %v1138
        %v1140 = vrot.slane %v542, 4
        %v1141 = vadd.f32 %v542, %v1140
        %v1142 = vrot.slane %v1141, 2
        %v1143 = vadd.f32 %v1141, %v1142
        %v1144 = vrot.slane %v1143, 1
        %v1145 = vadd.f32 %v1143, %v1144
        %v1146 = vrot.slane %v543, 4
        %v1147 = vadd.f32 %v543, %v1146
        %v1148 = vrot.slane %v1147, 2
        %v1149 = vadd.f32 %v1147, %v1148
        %v1150 = vrot.slane %v1149, 1
        %v1151 = vadd.f32 %v1149, %v1150
        %v1152 = vrot.slane %v544, 4
        %v1153 = vadd.f32 %v544, %v1152
        %v1154 = vrot.slane %v1153, 2
        %v1155 = vadd.f32 %v1153, %v1154
        %v1156 = vrot.slane %v1155, 1
        %v1157 = vadd.f32 %v1155, %v1156
        %v1158 = vrot.slane %v545, 4
        %v1159 = vadd.f32 %v545, %v1158
        %v1160 = vrot.slane %v1159, 2
        %v1161 = vadd.f32 %v1159, %v1160
        %v1162 = vrot.slane %v1161, 1
        %v1163 = vadd.f32 %v1161, %v1162
        %v1164 = vrot.slane %v546, 4
        %v1165 = vadd.f32 %v546, %v1164
        %v1166 = vrot.slane %v1165, 2
        %v1167 = vadd.f32 %v1165, %v1166
        %v1168 = vrot.slane %v1167, 1
        %v1169 = vadd.f32 %v1167, %v1168
        %v1170 = vrot.slane %v547, 4
        %v1171 = vadd.f32 %v547, %v1170
        %v1172 = vrot.slane %v1171, 2
        %v1173 = vadd.f32 %v1171, %v1172
        %v1174 = vrot.slane %v1173, 1
        %v1175 = vadd.f32 %v1173, %v1174
        %v1176 = vrot.slane %v548, 4
        %v1177 = vadd.f32 %v548, %v1176
        %v1178 = vrot.slane %v1177, 2
        %v1179 = vadd.f32 %v1177, %v1178
        %v1180 = vrot.slane %v1179, 1
        %v1181 = vadd.f32 %v1179, %v1180
        %v1182 = vrot.slane %v549, 4
        %v1183 = vadd.f32 %v549, %v1182
        %v1184 = vrot.slane %v1183, 2
        %v1185 = vadd.f32 %v1183, %v1184
        %v1186 = vrot.slane %v1185, 1
        %v1187 = vadd.f32 %v1185, %v1186
        %v1188 = vrot.slane %v550, 4
        %v1189 = vadd.f32 %v550, %v1188
        %v1190 = vrot.slane %v1189, 2
        %v1191 = vadd.f32 %v1189, %v1190
        %v1192 = vrot.slane %v1191, 1
        %v1193 = vadd.f32 %v1191, %v1192
        %v1194 = vrot.slane %v551, 4
        %v1195 = vadd.f32 %v551, %v1194
        %v1196 = vrot.slane %v1195, 2
        %v1197 = vadd.f32 %v1195, %v1196
        %v1198 = vrot.slane %v1197, 1
        %v1199 = vadd.f32 %v1197, %v1198
        %v1200 = vrot.slane %v552, 4
        %v1201 = vadd.f32 %v552, %v1200
        %v1202 = vrot.slane %v1201, 2
        %v1203 = vadd.f32 %v1201, %v1202
        %v1204 = vrot.slane %v1203, 1
        %v1205 = vadd.f32 %v1203, %v1204
        %v1206 = vrot.slane %v553, 4
        %v1207 = vadd.f32 %v553, %v1206
        %v1208 = vrot.slane %v1207, 2
        %v1209 = vadd.f32 %v1207, %v1208
        %v1210 = vrot.slane %v1209, 1
        %v1211 = vadd.f32 %v1209, %v1210
        %v1212 = vrot.slane %v554, 4
        %v1213 = vadd.f32 %v554, %v1212
        %v1214 = vrot.slane %v1213, 2
        %v1215 = vadd.f32 %v1213, %v1214
        %v1216 = vrot.slane %v1215, 1
        %v1217 = vadd.f32 %v1215, %v1216
        %v1218 = vrot.slane %v555, 4
        %v1219 = vadd.f32 %v555, %v1218
        %v1220 = vrot.slane %v1219, 2
        %v1221 = vadd.f32 %v1219, %v1220
        %v1222 = vrot.slane %v1221, 1
        %v1223 = vadd.f32 %v1221, %v1222
        %v1224 = vrot.slane %v556, 4
        %v1225 = vadd.f32 %v556, %v1224
        %v1226 = vrot.slane %v1225, 2
        %v1227 = vadd.f32 %v1225, %v1226
        %v1228 = vrot.slane %v1227, 1
        %v1229 = vadd.f32 %v1227, %v1228
        %v1230 = vrot.slane %v557, 4
        %v1231 = vadd.f32 %v557, %v1230
        %v1232 = vrot.slane %v1231, 2
        %v1233 = vadd.f32 %v1231, %v1232
        %v1234 = vrot.slane %v1233, 1
        %v1235 = vadd.f32 %v1233, %v1234
        %v1236 = vrot.slane %v558, 4
        %v1237 = vadd.f32 %v558, %v1236
        %v1238 = vrot.slane %v1237, 2
        %v1239 = vadd.f32 %v1237, %v1238
        %v1240 = vrot.slane %v1239, 1
        %v1241 = vadd.f32 %v1239, %v1240
        %v1242 = vrot.slane %v559, 4
        %v1243 = vadd.f32 %v559, %v1242
        %v1244 = vrot.slane %v1243, 2
        %v1245 = vadd.f32 %v1243, %v1244
        %v1246 = vrot.slane %v1245, 1
        %v1247 = vadd.f32 %v1245, %v1246
        %v1248 = vrot.slane %v560, 4
        %v1249 = vadd.f32 %v560, %v1248
        %v1250 = vrot.slane %v1249, 2
        %v1251 = vadd.f32 %v1249, %v1250
        %v1252 = vrot.slane %v1251, 1
        %v1253 = vadd.f32 %v1251, %v1252
        %v1254 = vrot.slane %v561, 4
        %v1255 = vadd.f32 %v561, %v1254
        %v1256 = vrot.slane %v1255, 2
        %v1257 = vadd.f32 %v1255, %v1256
        %v1258 = vrot.slane %v1257, 1
        %v1259 = vadd.f32 %v1257, %v1258
        %v1260 = vrot.slane %v562, 4
        %v1261 = vadd.f32 %v562, %v1260
        %v1262 = vrot.slane %v1261, 2
        %v1263 = vadd.f32 %v1261, %v1262
        %v1264 = vrot.slane %v1263, 1
        %v1265 = vadd.f32 %v1263, %v1264
        %v1266 = vrot.slane %v563, 4
        %v1267 = vadd.f32 %v563, %v1266
        %v1268 = vrot.slane %v1267, 2
        %v1269 = vadd.f32 %v1267, %v1268
        %v1270 = vrot.slane %v1269, 1
        %v1271 = vadd.f32 %v1269, %v1270
        %v1272 = vrot.slane %v564, 4
        %v1273 = vadd.f32 %v564, %v1272
        %v1274 = vrot.slane %v1273, 2
        %v1275 = vadd.f32 %v1273, %v1274
        %v1276 = vrot.slane %v1275, 1
        %v1277 = vadd.f32 %v1275, %v1276
        %v1278 = vrot.slane %v565, 4
        %v1279 = vadd.f32 %v565, %v1278
        %v1280 = vrot.slane %v1279, 2
        %v1281 = vadd.f32 %v1279, %v1280
        %v1282 = vrot.slane %v1281, 1
        %v1283 = vadd.f32 %v1281, %v1282
        %v1284 = vrot.slane %v566, 4
        %v1285 = vadd.f32 %v566, %v1284
        %v1286 = vrot.slane %v1285, 2
        %v1287 = vadd.f32 %v1285, %v1286
        %v1288 = vrot.slane %v1287, 1
        %v1289 = vadd.f32 %v1287, %v1288
        %v1290 = vrot.slane %v567, 4
        %v1291 = vadd.f32 %v567, %v1290
        %v1292 = vrot.slane %v1291, 2
        %v1293 = vadd.f32 %v1291, %v1292
        %v1294 = vrot.slane %v1293, 1
        %v1295 = vadd.f32 %v1293, %v1294
        %v1296 = vrot.slane %v568, 4
        %v1297 = vadd.f32 %v568, %v1296
        %v1298 = vrot.slane %v1297, 2
        %v1299 = vadd.f32 %v1297, %v1298
        %v1300 = vrot.slane %v1299, 1
        %v1301 = vadd.f32 %v1299, %v1300
        %v1302 = vrot.slane %v569, 4
        %v1303 = vadd.f32 %v569, %v1302
        %v1304 = vrot.slane %v1303, 2
        %v1305 = vadd.f32 %v1303, %v1304
        %v1306 = vrot.slane %v1305, 1
        %v1307 = vadd.f32 %v1305, %v1306
        %v1308 = vrot.slane %v570, 4
        %v1309 = vadd.f32 %v570, %v1308
        %v1310 = vrot.slane %v1309, 2
        %v1311 = vadd.f32 %v1309, %v1310
        %v1312 = vrot.slane %v1311, 1
        %v1313 = vadd.f32 %v1311, %v1312
        %v1314 = vrot.slane %v571, 4
        %v1315 = vadd.f32 %v571, %v1314
        %v1316 = vrot.slane %v1315, 2
        %v1317 = vadd.f32 %v1315, %v1316
        %v1318 = vrot.slane %v1317, 1
        %v1319 = vadd.f32 %v1317, %v1318
        %v1320 = vrot.slane %v572, 4
        %v1321 = vadd.f32 %v572, %v1320
        %v1322 = vrot.slane %v1321, 2
        %v1323 = vadd.f32 %v1321, %v1322
        %v1324 = vrot.slane %v1323, 1
        %v1325 = vadd.f32 %v1323, %v1324
        %v1326 = vrot.slane %v573, 4
        %v1327 = vadd.f32 %v573, %v1326
        %v1328 = vrot.slane %v1327, 2
        %v1329 = vadd.f32 %v1327, %v1328
        %v1330 = vrot.slane %v1329, 1
        %v1331 = vadd.f32 %v1329, %v1330
        %v1332 = vrot.slane %v574, 4
        %v1333 = vadd.f32 %v574, %v1332
        %v1334 = vrot.slane %v1333, 2
        %v1335 = vadd.f32 %v1333, %v1334
        %v1336 = vrot.slane %v1335, 1
        %v1337 = vadd.f32 %v1335, %v1336
        %v1338 = vrot.slane %v575, 4
        %v1339 = vadd.f32 %v575, %v1338
        %v1340 = vrot.slane %v1339, 2
        %v1341 = vadd.f32 %v1339, %v1340
        %v1342 = vrot.slane %v1341, 1
        %v1343 = vadd.f32 %v1341, %v1342
        %v1344 = vld [vmem:[#allocation7] sm:$0xff]
        %v1345 = vld [vmem:[#allocation7 + $0x8] sm:$0xff]
        %v1346 = vld [vmem:[#allocation7 + $0x10] sm:$0xff]
        %v1347 = vld [vmem:[#allocation7 + $0x18] sm:$0xff]
        %v1348 = vld [vmem:[#allocation7 + $0x20] sm:$0xff]
        %v1349 = vld [vmem:[#allocation7 + $0x28] sm:$0xff]
        %v1350 = vld [vmem:[#allocation7 + $0x30] sm:$0xff]
        %v1351 = vld [vmem:[#allocation7 + $0x38] sm:$0xff]
        %v1352 = vld [vmem:[#allocation7 + $0x40] sm:$0xff]
        %v1353 = vld [vmem:[#allocation7 + $0x48] sm:$0xff]
        %v1354 = vld [vmem:[#allocation7 + $0x50] sm:$0xff]
        %v1355 = vld [vmem:[#allocation7 + $0x58] sm:$0xff]
        %v1356 = vld [vmem:[#allocation7 + $0x60] sm:$0xff]
        %v1357 = vld [vmem:[#allocation7 + $0x68] sm:$0xff]
        %v1358 = vld [vmem:[#allocation7 + $0x70] sm:$0xff]
        %v1359 = vld [vmem:[#allocation7 + $0x78] sm:$0xff]
        %v1360 = vld [vmem:[#allocation8] sm:$0xff]
        %v1361 = vld [vmem:[#allocation8 + $0x8] sm:$0xff]
        %v1362 = vld [vmem:[#allocation8 + $0x10] sm:$0xff]
        %v1363 = vld [vmem:[#allocation8 + $0x18] sm:$0xff]
        %v1364 = vld [vmem:[#allocation8 + $0x20] sm:$0xff]
        %v1365 = vld [vmem:[#allocation8 + $0x28] sm:$0xff]
        %v1366 = vld [vmem:[#allocation8 + $0x30] sm:$0xff]
        %v1367 = vld [vmem:[#allocation8 + $0x38] sm:$0xff]
        %v1368 = vld [vmem:[#allocation8 + $0x40] sm:$0xff]
        %v1369 = vld [vmem:[#allocation8 + $0x48] sm:$0xff]
        %v1370 = vld [vmem:[#allocation8 + $0x50] sm:$0xff]
        %v1371 = vld [vmem:[#allocation8 + $0x58] sm:$0xff]
        %v1372 = vld [vmem:[#allocation8 + $0x60] sm:$0xff]
        %v1373 = vld [vmem:[#allocation8 + $0x68] sm:$0xff]
        %v1374 = vld [vmem:[#allocation8 + $0x70] sm:$0xff]
        %v1375 = vld [vmem:[#allocation8 + $0x78] sm:$0xff]
        %vm1504 = vcmask 1041409
        %v1505 = vsel %vm1504, %v587, %v581
        %vm1506 = vcmask 1042434
        %v1507 = vsel %vm1506, %v593, %v1505
        %vm1508 = vcmask 1043459
        %v1509 = vsel %vm1508, %v599, %v1507
        %vm1510 = vcmask 1044484
        %v1511 = vsel %vm1510, %v605, %v1509
        %vm1512 = vcmask 1045509
        %v1513 = vsel %vm1512, %v611, %v1511
        %vm1514 = vcmask 1046534
        %v1515 = vsel %vm1514, %v617, %v1513
        %vm1516 = vcmask 1047559
        %v1517 = vsel %vm1516, %v623, %v1515
        %v1518 = vsel %vm1504, %v635, %v629
        %v1519 = vsel %vm1506, %v641, %v1518
        %v1520 = vsel %vm1508, %v647, %v1519
        %v1521 = vsel %vm1510, %v653, %v1520
        %v1522 = vsel %vm1512, %v659, %v1521
        %v1523 = vsel %vm1514, %v665, %v1522
        %v1524 = vsel %vm1516, %v671, %v1523
        %v1525 = vsel %vm1504, %v683, %v677
        %v1526 = vsel %vm1506, %v689, %v1525
        %v1527 = vsel %vm1508, %v695, %v1526
        %v1528 = vsel %vm1510, %v701, %v1527
        %v1529 = vsel %vm1512, %v707, %v1528
        %v1530 = vsel %vm1514, %v713, %v1529
        %v1531 = vsel %vm1516, %v719, %v1530
        %v1532 = vsel %vm1504, %v731, %v725
        %v1533 = vsel %vm1506, %v737, %v1532
        %v1534 = vsel %vm1508, %v743, %v1533
        %v1535 = vsel %vm1510, %v749, %v1534
        %v1536 = vsel %vm1512, %v755, %v1535
        %v1537 = vsel %vm1514, %v761, %v1536
        %v1538 = vsel %vm1516, %v767, %v1537
        %v1539 = vsel %vm1504, %v779, %v773
        %v1540 = vsel %vm1506, %v785, %v1539
        %v1541 = vsel %vm1508, %v791, %v1540
        %v1542 = vsel %vm1510, %v797, %v1541
        %v1543 = vsel %vm1512, %v803, %v1542
        %v1544 = vsel %vm1514, %v809, %v1543
        %v1545 = vsel %vm1516, %v815, %v1544
        %v1546 = vsel %vm1504, %v827, %v821
        %v1547 = vsel %vm1506, %v833, %v1546
        %v1548 = vsel %vm1508, %v839, %v1547
        %v1549 = vsel %vm1510, %v845, %v1548
        %v1550 = vsel %vm1512, %v851, %v1549
        %v1551 = vsel %vm1514, %v857, %v1550
        %v1552 = vsel %vm1516, %v863, %v1551
        %v1553 = vsel %vm1504, %v875, %v869
        %v1554 = vsel %vm1506, %v881, %v1553
        %v1555 = vsel %vm1508, %v887, %v1554
        %v1556 = vsel %vm1510, %v893, %v1555
        %v1557 = vsel %vm1512, %v899, %v1556
        %v1558 = vsel %vm1514, %v905, %v1557
        %v1559 = vsel %vm1516, %v911, %v1558
        %v1560 = vsel %vm1504, %v923, %v917
        %v1561 = vsel %vm1506, %v929, %v1560
        %v1562 = vsel %vm1508, %v935, %v1561
        %v1563 = vsel %vm1510, %v941, %v1562
        %v1564 = vsel %vm1512, %v947, %v1563
        %v1565 = vsel %vm1514, %v953, %v1564
        %v1566 = vsel %vm1516, %v959, %v1565
        %v1567 = vsel %vm1504, %v971, %v965
        %v1568 = vsel %vm1506, %v977, %v1567
        %v1569 = vsel %vm1508, %v983, %v1568
        %v1570 = vsel %vm1510, %v989, %v1569
        %v1571 = vsel %vm1512, %v995, %v1570
        %v1572 = vsel %vm1514, %v1001, %v1571
        %v1573 = vsel %vm1516, %v1007, %v1572
        %v1574 = vsel %vm1504, %v1019, %v1013
        %v1575 = vsel %vm1506, %v1025, %v1574
        %v1576 = vsel %vm1508, %v1031, %v1575
        %v1577 = vsel %vm1510, %v1037, %v1576
        %v1578 = vsel %vm1512, %v1043, %v1577
        %v1579 = vsel %vm1514, %v1049, %v1578
        %v1580 = vsel %vm1516, %v1055, %v1579
        %v1581 = vsel %vm1504, %v1067, %v1061
        %v1582 = vsel %vm1506, %v1073, %v1581
        %v1583 = vsel %vm1508, %v1079, %v1582
        %v1584 = vsel %vm1510, %v1085, %v1583
        %v1585 = vsel %vm1512, %v1091, %v1584
        %v1586 = vsel %vm1514, %v1097, %v1585
        %v1587 = vsel %vm1516, %v1103, %v1586
        %v1588 = vsel %vm1504, %v1115, %v1109
        %v1589 = vsel %vm1506, %v1121, %v1588
        %v1590 = vsel %vm1508, %v1127, %v1589
        %v1591 = vsel %vm1510, %v1133, %v1590
        %v1592 = vsel %vm1512, %v1139, %v1591
        %v1593 = vsel %vm1514, %v1145, %v1592
        %v1594 = vsel %vm1516, %v1151, %v1593
        %v1595 = vsel %vm1504, %v1163, %v1157
        %v1596 = vsel %vm1506, %v1169, %v1595
        %v1597 = vsel %vm1508, %v1175, %v1596
        %v1598 = vsel %vm1510, %v1181, %v1597
        %v1599 = vsel %vm1512, %v1187, %v1598
        %v1600 = vsel %vm1514, %v1193, %v1599
        %v1601 = vsel %vm1516, %v1199, %v1600
        %v1602 = vsel %vm1504, %v1211, %v1205
        %v1603 = vsel %vm1506, %v1217, %v1602
        %v1604 = vsel %vm1508, %v1223, %v1603
        %v1605 = vsel %vm1510, %v1229, %v1604
        %v1606 = vsel %vm1512, %v1235, %v1605
        %v1607 = vsel %vm1514, %v1241, %v1606
        %v1608 = vsel %vm1516, %v1247, %v1607
        %v1609 = vsel %vm1504, %v1259, %v1253
        %v1610 = vsel %vm1506, %v1265, %v1609
        %v1611 = vsel %vm1508, %v1271, %v1610
        %v1612 = vsel %vm1510, %v1277, %v1611
        %v1613 = vsel %vm1512, %v1283, %v1612
        %v1614 = vsel %vm1514, %v1289, %v1613
        %v1615 = vsel %vm1516, %v1295, %v1614
        %v1616 = vsel %vm1504, %v1307, %v1301
        %v1617 = vsel %vm1506, %v1313, %v1616
        %v1618 = vsel %vm1508, %v1319, %v1617
        %v1619 = vsel %vm1510, %v1325, %v1618
        %v1620 = vsel %vm1512, %v1331, %v1619
        %v1621 = vsel %vm1514, %v1337, %v1620
        %v1622 = vsel %vm1516, %v1343, %v1621
        %1639 = vmatprep.subr.mxu0 0.0
        %1640 = vmatpush1.msra.mxu0 %v1375
        %1641 = vmatprep.subr.mxu0 0.0
        %1642 = vmatpush1.msra.mxu0 %v1374
        %1643 = vmatprep.subr.mxu0 0.0
        %1644 = vmatpush1.msra.mxu0 %v1373
        %1645 = vmatprep.subr.mxu0 0.0
        %1646 = vmatpush1.msra.mxu0 %v1372
        %1647 = vmatprep.subr.mxu0 0.0
        %1648 = vmatpush1.msra.mxu0 %v1371
        %1649 = vmatprep.subr.mxu0 0.0
        %1650 = vmatpush1.msra.mxu0 %v1370
        %1651 = vmatprep.subr.mxu0 0.0
        %1652 = vmatpush1.msra.mxu0 %v1369
        %1653 = vmatprep.subr.mxu0 0.0
        %1654 = vmatpush1.msra.mxu0 %v1368
        %1655 = vmatprep.subr.mxu0 0.0
        %1656 = vmatpush1.msra.mxu0 %v1367
        %1657 = vmatprep.subr.mxu0 0.0
        %1658 = vmatpush1.msra.mxu0 %v1366
        %1659 = vmatprep.subr.mxu0 0.0
        %1660 = vmatpush1.msra.mxu0 %v1365
        %1661 = vmatprep.subr.mxu0 0.0
        %1662 = vmatpush1.msra.mxu0 %v1364
        %1663 = vmatprep.subr.mxu0 0.0
        %1664 = vmatpush1.msra.mxu0 %v1363
        %1665 = vmatprep.subr.mxu0 0.0
        %1666 = vmatpush1.msra.mxu0 %v1362
        %1667 = vmatprep.subr.mxu0 0.0
        %1668 = vmatpush1.msra.mxu0 %v1361
        %1669 = vmatprep.subr.mxu0 0.0
        %1670 = vmatpush1.msra.mxu0 %v1360
        %1671 = vmatprep.subr.mxu0 0.0
        %1672 = vmatpush2.msra.mxu0 0.0
        %1673 = vmatprep.subr.mxu0 0.0
        %1674 = vmatpush2.msra.mxu0 0.0
        %1675 = vmatprep.subr.mxu0 0.0
        %1676 = vmatpush2.msra.mxu0 0.0
        %1677 = vmatprep.subr.mxu0 0.0
        %1678 = vmatpush2.msra.mxu0 0.0
        %1679 = vmatprep.subr.mxu0 0.0
        %1680 = vmatpush2.msra.mxu0 0.0
        %1681 = vmatprep.subr.mxu0 0.0
        %1682 = vmatpush2.msra.mxu0 0.0
        %1683 = vmatprep.subr.mxu0 0.0
        %1684 = vmatpush2.msra.mxu0 0.0
        %1685 = vmatprep.subr.mxu0 0.0
        %1686 = vmatpush2.msra.mxu0 0.0
        %1687 = vmatprep.subr.mxu0 0.0
        %1688 = vmatpush2.msra.mxu0 0.0
        %1689 = vmatprep.subr.mxu0 0.0
        %1690 = vmatpush2.msra.mxu0 0.0
        %1691 = vmatprep.subr.mxu0 0.0
        %1692 = vmatpush2.msra.mxu0 0.0
        %1693 = vmatprep.subr.mxu0 0.0
        %1694 = vmatpush2.msra.mxu0 0.0
        %1695 = vmatprep.subr.mxu0 0.0
        %1696 = vmatpush2.msra.mxu0 0.0
        %1697 = vmatprep.subr.mxu0 0.0
        %1698 = vmatpush2.msra.mxu0 0.0
        %1699 = vmatprep.subr.mxu0 0.0
        %1700 = vmatpush2.msra.mxu0 0.0
        %1701 = vmatprep.subr.mxu0 0.0
        %1702 = vmatpush2.msra.mxu0 0.0
        %1703 = vmatprep.mubr.f32.mxu0 0.0
        %1704 = vmatmul.mubr.f32.gmra.mxu0 %v1517
        %v1705 = vpop.f32.mrf.mxu0
        %v1706 = vadd.f32 0.0, %v1705
        %v1707 = vpop.f32.mrf.mxu0
        %1708 = vmatprep.mubr.f32.mxu0 0.0
        %1709 = vmatmul.mubr.f32.gmra.mxu0 %v1524
        %v1710 = vpop.f32.mrf.mxu0
        %v1711 = vadd.f32 0.0, %v1710
        %v1712 = vpop.f32.mrf.mxu0
        %1713 = vmatprep.mubr.f32.mxu0 0.0
        %1714 = vmatmul.mubr.f32.gmra.mxu0 %v1531
        %v1715 = vpop.f32.mrf.mxu0
        %v1716 = vadd.f32 0.0, %v1715
        %v1717 = vpop.f32.mrf.mxu0
        %1718 = vmatprep.mubr.f32.mxu0 0.0
        %1719 = vmatmul.mubr.f32.gmra.mxu0 %v1538
        %v1720 = vpop.f32.mrf.mxu0
        %v1721 = vadd.f32 0.0, %v1720
        %v1722 = vpop.f32.mrf.mxu0
        %1723 = vmatprep.mubr.f32.mxu0 0.0
        %1724 = vmatmul.mubr.f32.gmra.mxu0 %v1545
        %v1725 = vpop.f32.mrf.mxu0
        %v1726 = vadd.f32 0.0, %v1725
        %v1727 = vpop.f32.mrf.mxu0
        %1728 = vmatprep.mubr.f32.mxu0 0.0
        %1729 = vmatmul.mubr.f32.gmra.mxu0 %v1552
        %v1730 = vpop.f32.mrf.mxu0
        %v1731 = vadd.f32 0.0, %v1730
        %v1732 = vpop.f32.mrf.mxu0
        %1733 = vmatprep.mubr.f32.mxu0 0.0
        %1734 = vmatmul.mubr.f32.gmra.mxu0 %v1559
        %v1735 = vpop.f32.mrf.mxu0
        %v1736 = vadd.f32 0.0, %v1735
        %v1737 = vpop.f32.mrf.mxu0
        %1738 = vmatprep.mubr.f32.mxu0 0.0
        %1739 = vmatmul.mubr.f32.gmra.mxu0 %v1566
        %v1740 = vpop.f32.mrf.mxu0
        %v1741 = vadd.f32 0.0, %v1740
        %v1742 = vpop.f32.mrf.mxu0
        %1743 = vmatprep.mubr.f32.mxu0 0.0
        %1744 = vmatmul.mubr.f32.gmra.mxu0 %v1573
        %v1745 = vpop.f32.mrf.mxu0
        %v1746 = vadd.f32 0.0, %v1745
        %v1747 = vpop.f32.mrf.mxu0
        %1748 = vmatprep.mubr.f32.mxu0 0.0
        %1749 = vmatmul.mubr.f32.gmra.mxu0 %v1580
        %v1750 = vpop.f32.mrf.mxu0
        %v1751 = vadd.f32 0.0, %v1750
        %v1752 = vpop.f32.mrf.mxu0
        %1753 = vmatprep.mubr.f32.mxu0 0.0
        %1754 = vmatmul.mubr.f32.gmra.mxu0 %v1587
        %v1755 = vpop.f32.mrf.mxu0
        %v1756 = vadd.f32 0.0, %v1755
        %v1757 = vpop.f32.mrf.mxu0
        %1758 = vmatprep.mubr.f32.mxu0 0.0
        %1759 = vmatmul.mubr.f32.gmra.mxu0 %v1594
        %v1760 = vpop.f32.mrf.mxu0
        %v1761 = vadd.f32 0.0, %v1760
        %v1762 = vpop.f32.mrf.mxu0
        %1763 = vmatprep.mubr.f32.mxu0 0.0
        %1764 = vmatmul.mubr.f32.gmra.mxu0 %v1601
        %v1765 = vpop.f32.mrf.mxu0
        %v1766 = vadd.f32 0.0, %v1765
        %v1767 = vpop.f32.mrf.mxu0
        %1768 = vmatprep.mubr.f32.mxu0 0.0
        %1769 = vmatmul.mubr.f32.gmra.mxu0 %v1608
        %v1770 = vpop.f32.mrf.mxu0
        %v1771 = vadd.f32 0.0, %v1770
        %v1772 = vpop.f32.mrf.mxu0
        %1773 = vmatprep.mubr.f32.mxu0 0.0
        %1774 = vmatmul.mubr.f32.gmra.mxu0 %v1615
        %v1775 = vpop.f32.mrf.mxu0
        %v1776 = vadd.f32 0.0, %v1775
        %v1777 = vpop.f32.mrf.mxu0
        %1778 = vmatprep.mubr.f32.mxu0 0.0
        %1779 = vmatmul.mubr.f32.gmra.mxu0 %v1622
        %v1780 = vpop.f32.mrf.mxu0
        %v1781 = vadd.f32 0.0, %v1780
        %v1782 = vpop.f32.mrf.mxu0
        %1783 = vdwg.mxu0
        %1784 = vmatprep.subr.mxu0 0.0
        %1785 = vmatpush1.msra.mxu0 %v1359
        %1786 = vmatprep.subr.mxu0 0.0
        %1787 = vmatpush1.msra.mxu0 %v1358
        %1788 = vmatprep.subr.mxu0 0.0
        %1789 = vmatpush1.msra.mxu0 %v1357
        %1790 = vmatprep.subr.mxu0 0.0
        %1791 = vmatpush1.msra.mxu0 %v1356
        %1792 = vmatprep.subr.mxu0 0.0
        %1793 = vmatpush1.msra.mxu0 %v1355
        %1794 = vmatprep.subr.mxu0 0.0
        %1795 = vmatpush1.msra.mxu0 %v1354
        %1796 = vmatprep.subr.mxu0 0.0
        %1797 = vmatpush1.msra.mxu0 %v1353
        %1798 = vmatprep.subr.mxu0 0.0
        %1799 = vmatpush1.msra.mxu0 %v1352
        %1800 = vmatprep.subr.mxu0 0.0
        %1801 = vmatpush1.msra.mxu0 %v1351
        %1802 = vmatprep.subr.mxu0 0.0
        %1803 = vmatpush1.msra.mxu0 %v1350
        %1804 = vmatprep.subr.mxu0 0.0
        %1805 = vmatpush1.msra.mxu0 %v1349
        %1806 = vmatprep.subr.mxu0 0.0
        %1807 = vmatpush1.msra.mxu0 %v1348
        %1808 = vmatprep.subr.mxu0 0.0
        %1809 = vmatpush1.msra.mxu0 %v1347
        %1810 = vmatprep.subr.mxu0 0.0
        %1811 = vmatpush1.msra.mxu0 %v1346
        %1812 = vmatprep.subr.mxu0 0.0
        %1813 = vmatpush1.msra.mxu0 %v1345
        %1814 = vmatprep.subr.mxu0 0.0
        %1815 = vmatpush1.msra.mxu0 %v1344
        %1816 = vmatprep.subr.mxu0 0.0
        %1817 = vmatpush2.msra.mxu0 0.0
        %1818 = vmatprep.subr.mxu0 0.0
        %1819 = vmatpush2.msra.mxu0 0.0
        %1820 = vmatprep.subr.mxu0 0.0
        %1821 = vmatpush2.msra.mxu0 0.0
        %1822 = vmatprep.subr.mxu0 0.0
        %1823 = vmatpush2.msra.mxu0 0.0
        %1824 = vmatprep.subr.mxu0 0.0
        %1825 = vmatpush2.msra.mxu0 0.0
        %1826 = vmatprep.subr.mxu0 0.0
        %1827 = vmatpush2.msra.mxu0 0.0
        %1828 = vmatprep.subr.mxu0 0.0
        %1829 = vmatpush2.msra.mxu0 0.0
        %1830 = vmatprep.subr.mxu0 0.0
        %1831 = vmatpush2.msra.mxu0 0.0
        %1832 = vmatprep.subr.mxu0 0.0
        %1833 = vmatpush2.msra.mxu0 0.0
        %1834 = vmatprep.subr.mxu0 0.0
        %1835 = vmatpush2.msra.mxu0 0.0
        %1836 = vmatprep.subr.mxu0 0.0
        %1837 = vmatpush2.msra.mxu0 0.0
        %1838 = vmatprep.subr.mxu0 0.0
        %1839 = vmatpush2.msra.mxu0 0.0
        %1840 = vmatprep.subr.mxu0 0.0
        %1841 = vmatpush2.msra.mxu0 0.0
        %1842 = vmatprep.subr.mxu0 0.0
        %1843 = vmatpush2.msra.mxu0 0.0
        %1844 = vmatprep.subr.mxu0 0.0
        %1845 = vmatpush2.msra.mxu0 0.0
        %1846 = vmatprep.subr.mxu0 0.0
        %1847 = vmatpush2.msra.mxu0 0.0
        %1848 = vmatprep.mubr.f32.mxu0 0.0
        %1849 = vmatmul.mubr.f32.gmra.mxu0 %v304
        %v1850 = vpop.f32.mrf.mxu0
        %v1851 = vadd.f32 %v1706, %v1850
        %v1852 = vpop.f32.mrf.mxu0
        %1853 = vmatprep.mubr.f32.mxu0 0.0
        %1854 = vmatmul.mubr.f32.gmra.mxu0 %v305
        %v1855 = vpop.f32.mrf.mxu0
        %v1856 = vadd.f32 %v1711, %v1855
        %v1857 = vpop.f32.mrf.mxu0
        %1858 = vmatprep.mubr.f32.mxu0 0.0
        %1859 = vmatmul.mubr.f32.gmra.mxu0 %v306
        %v1860 = vpop.f32.mrf.mxu0
        %v1861 = vadd.f32 %v1716, %v1860
        %v1862 = vpop.f32.mrf.mxu0
        %1863 = vmatprep.mubr.f32.mxu0 0.0
        %1864 = vmatmul.mubr.f32.gmra.mxu0 %v307
        %v1865 = vpop.f32.mrf.mxu0
        %v1866 = vadd.f32 %v1721, %v1865
        %v1867 = vpop.f32.mrf.mxu0
        %1868 = vmatprep.mubr.f32.mxu0 0.0
        %1869 = vmatmul.mubr.f32.gmra.mxu0 %v308
        %v1870 = vpop.f32.mrf.mxu0
        %v1871 = vadd.f32 %v1726, %v1870
        %v1872 = vpop.f32.mrf.mxu0
        %1873 = vmatprep.mubr.f32.mxu0 0.0
        %1874 = vmatmul.mubr.f32.gmra.mxu0 %v309
        %v1875 = vpop.f32.mrf.mxu0
        %v1876 = vadd.f32 %v1731, %v1875
        %v1877 = vpop.f32.mrf.mxu0
        %1878 = vmatprep.mubr.f32.mxu0 0.0
        %1879 = vmatmul.mubr.f32.gmra.mxu0 %v310
        %v1880 = vpop.f32.mrf.mxu0
        %v1881 = vadd.f32 %v1736, %v1880
        %v1882 = vpop.f32.mrf.mxu0
        %1883 = vmatprep.mubr.f32.mxu0 0.0
        %1884 = vmatmul.mubr.f32.gmra.mxu0 %v311
        %v1885 = vpop.f32.mrf.mxu0
        %v1886 = vadd.f32 %v1741, %v1885
        %v1887 = vpop.f32.mrf.mxu0
        %1888 = vmatprep.mubr.f32.mxu0 0.0
        %1889 = vmatmul.mubr.f32.gmra.mxu0 %v312
        %v1890 = vpop.f32.mrf.mxu0
        %v1891 = vadd.f32 %v1746, %v1890
        %v1892 = vpop.f32.mrf.mxu0
        %1893 = vmatprep.mubr.f32.mxu0 0.0
        %1894 = vmatmul.mubr.f32.gmra.mxu0 %v313
        %v1895 = vpop.f32.mrf.mxu0
        %v1896 = vadd.f32 %v1751, %v1895
        %v1897 = vpop.f32.mrf.mxu0
        %1898 = vmatprep.mubr.f32.mxu0 0.0
        %1899 = vmatmul.mubr.f32.gmra.mxu0 %v314
        %v1900 = vpop.f32.mrf.mxu0
        %v1901 = vadd.f32 %v1756, %v1900
        %v1902 = vpop.f32.mrf.mxu0
        %1903 = vmatprep.mubr.f32.mxu0 0.0
        %1904 = vmatmul.mubr.f32.gmra.mxu0 %v315
        %v1905 = vpop.f32.mrf.mxu0
        %v1906 = vadd.f32 %v1761, %v1905
        %v1907 = vpop.f32.mrf.mxu0
        %1908 = vmatprep.mubr.f32.mxu0 0.0
        %1909 = vmatmul.mubr.f32.gmra.mxu0 %v316
        %v1910 = vpop.f32.mrf.mxu0
        %v1911 = vadd.f32 %v1766, %v1910
        %v1912 = vpop.f32.mrf.mxu0
        %1913 = vmatprep.mubr.f32.mxu0 0.0
        %1914 = vmatmul.mubr.f32.gmra.mxu0 %v317
        %v1915 = vpop.f32.mrf.mxu0
        %v1916 = vadd.f32 %v1771, %v1915
        %v1917 = vpop.f32.mrf.mxu0
        %1918 = vmatprep.mubr.f32.mxu0 0.0
        %1919 = vmatmul.mubr.f32.gmra.mxu0 %v318
        %v1920 = vpop.f32.mrf.mxu0
        %v1921 = vadd.f32 %v1776, %v1920
        %v1922 = vpop.f32.mrf.mxu0
        %1923 = vmatprep.mubr.f32.mxu0 0.0
        %1924 = vmatmul.mubr.f32.gmra.mxu0 %v319
        %v1925 = vpop.f32.mrf.mxu0
        %v1926 = vadd.f32 %v1781, %v1925
        %v1927 = vpop.f32.mrf.mxu0
        %1928 = vdwg.mxu0
        %v1929 = vmax.f32 %v1851, 0.0
        %v1930 = vmax.f32 %v1856, 0.0
        %v1931 = vmax.f32 %v1861, 0.0
        %v1932 = vmax.f32 %v1866, 0.0
        %v1933 = vmax.f32 %v1871, 0.0
        %v1934 = vmax.f32 %v1876, 0.0
        %v1935 = vmax.f32 %v1881, 0.0
        %v1936 = vmax.f32 %v1886, 0.0
        %v1937 = vmax.f32 %v1891, 0.0
        %v1938 = vmax.f32 %v1896, 0.0
        %v1939 = vmax.f32 %v1901, 0.0
        %v1940 = vmax.f32 %v1906, 0.0
        %v1941 = vmax.f32 %v1911, 0.0
        %v1942 = vmax.f32 %v1916, 0.0
        %v1943 = vmax.f32 %v1921, 0.0
        %v1944 = vmax.f32 %v1926, 0.0
        %1945 = vst [vmem:[%s284] sm:$0xff] %v1929
        %1946 = vst [vmem:[%s284 + $0x8] sm:$0xff] %v1930
        %1947 = vst [vmem:[%s284 + $0x10] sm:$0xff] %v1931
        %1948 = vst [vmem:[%s284 + $0x18] sm:$0xff] %v1932
        %1949 = vst [vmem:[%s284 + $0x20] sm:$0xff] %v1933
        %1950 = vst [vmem:[%s284 + $0x28] sm:$0xff] %v1934
        %1951 = vst [vmem:[%s284 + $0x30] sm:$0xff] %v1935
        %1952 = vst [vmem:[%s284 + $0x38] sm:$0xff] %v1936
        %1953 = vst [vmem:[%s284 + $0x40] sm:$0xff] %v1937
        %1954 = vst [vmem:[%s284 + $0x48] sm:$0xff] %v1938
        %1955 = vst [vmem:[%s284 + $0x50] sm:$0xff] %v1939
        %1956 = vst [vmem:[%s284 + $0x58] sm:$0xff] %v1940
        %1957 = vst [vmem:[%s284 + $0x60] sm:$0xff] %v1941
        %1958 = vst [vmem:[%s284 + $0x68] sm:$0xff] %v1942
        %1959 = vst [vmem:[%s284 + $0x70] sm:$0xff] %v1943
        %1960 = vst [vmem:[%s284 + $0x78] sm:$0xff] %v1944
        %s1961 = sand.u32 %s127, 1
        %s1962 = scalar_lea.sflag [#allocation4], %s1961
        %s1963 = sand.u32 %s127, 1
        %s1964 = smul.addr %s1963, 128
        %s1965 = scalar_lea.vmem [#allocation10], %s1964
        // Predicated region
        $region53: #{tpu_custom_call.1} parent=35 // pred_check
          %p1966 = pneg %p137
        $region54: #{tpu_custom_call.1} parent=35 // pred_check_branch
          %1968 = sbr.rel (%p1966) target = $region56
        $region55: #{tpu_custom_call.1} parent=35 // pred_region
          %s1969 = smul.u32 16, %s25
          %s1971 = ssub.s32 2048, 2048
          %1972 = vsyncadd %s1962, %s1971
          %s1973 = smul.addr %s1969, 128
          %s1974 = scalar_lea.hbm %s4, %s1973
          %s1975 = sshll.u32 %s1965, 4
          %s1976 = int_to_ptr.vmem [resolvable:$true] %s1975
          %1981 = dma.vmem_to_hbm [thread:$0]  %s1976, 2048, %s1974, %s1962, 128, 128, 8
        $region56: #{tpu_custom_call.1} parent=35 // pred_fallthru
          _
      $region36: #{tpu_custom_call.1} parent=5 // pred_fallthru
        _
      %p1982 = scmp.le.s32.totalorder 2, %s20
      // Predicated region
      $region57: #{tpu_custom_call.1} parent=5 // pred_check
        %p1983 = pneg %p1982
      $region58: #{tpu_custom_call.1} parent=5 // pred_check_branch
        %1985 = sbr.rel (%p1983) target = $region60
      $region59: #{tpu_custom_call.1} parent=5 // pred_region
        %s1986 = ssub.s32 %s20, 2
        // Predicated region
        $region61: #{tpu_custom_call.1} parent=59 // pred_check
          %p1987 = pneg %p143
        $region62: #{tpu_custom_call.1} parent=59 // pred_check_branch
          %1989 = sbr.rel (%p1987) target = $region64
        $region63: #{tpu_custom_call.1} parent=59 // pred_region
          %s1990 = sand.u32 %s128, 1
          %s1991 = scalar_lea.sflag [#allocation4], %s1990
          %s1992 = sand.u32 %s128, 1
          %s1993 = smul.addr %s1992, 128
          %s1994 = scalar_lea.vmem [#allocation10], %s1993
          %1995 = dma.done %s1991, 2048
        $region64: #{tpu_custom_call.1} parent=59 // pred_fallthru
          _
      $region60: #{tpu_custom_call.1} parent=5 // pred_fallthru
        _
    $region6: #{tpu_custom_call.1} parent=1 // loop_footer
      %s24 = sadd.s32 1, %s20
    $region7: #{tpu_custom_call.1} parent=1 // loop_footer_branch
      %19 = sbr.rel target = $region3
    $region8: #{tpu_custom_call.1} parent=1 // loop_exit
      _
    %1996 = vsyncpa [#allocation3], 1
    %s1997 = scalar_lea.sflag [#allocation3], 1
    %1998 = vsyncpa %s1997, 1
    %1999 = vsyncpa [#allocation6], 1
    %s2000 = scalar_lea.sflag [#allocation6], 1
    %2001 = vsyncpa %s2000, 1
    %2002 = vsyncpa [#allocation9], 1
    %2003 = vsyncpa [#allocation4], 1
    %s2004 = scalar_lea.sflag [#allocation4], 1
    %2005 = vsyncpa %s2004, 1

</llo_original>
